<compile_context>
chip_gen: v7x
topology: tpu7x:2x2x1
jax: 0.10.0
libtpu: 0.0.40
codegen_flags: <defaults>
</compile_context>

<pallas_src>
import functools

import jax
import jax.numpy as jnp
from jax.experimental import pallas as pl
from jax.experimental.pallas import tpu as pltpu


def _dagmm_kernel(x_ref, we_t_ref, be_ref, wd_t_ref, bd_ref,
                  w1_t_ref, b1_ref, w2_t_ref, b2_ref,
                  dec_ref, packed_ref, *, enc_dim, n_gmm, out_width):
    latent_dim = enc_dim + 2

    # ---- autoencoder (MXU, f32 accumulation) ----
    enc = jnp.tanh(jnp.dot(x_ref[...], we_t_ref[...],
                           preferred_element_type=jnp.float32) + be_ref[...])
    dec = jnp.dot(enc.astype(wd_t_ref.dtype), wd_t_ref[...],
                  preferred_element_type=jnp.float32) + bd_ref[...]
    dec_ref[...] = dec.astype(dec_ref.dtype)

    # ---- reconstruction features (f32 row reductions over D) ----
    x = x_ref[...].astype(jnp.float32)
    x_sq = jnp.sum(x * x, axis=1, keepdims=True)               # ||x||^2
    d_sq = jnp.sum(dec * dec, axis=1, keepdims=True)           # ||dec||^2
    xd = jnp.sum(x * dec, axis=1, keepdims=True)                # <x, dec>
    dd = jnp.maximum(x_sq + d_sq - 2.0 * xd, 0.0)               # ||x - dec||^2

    x_norm = jnp.sqrt(x_sq)
    d_norm = jnp.sqrt(d_sq)
    # F.cosine_similarity(..., eps=1e-8): dot / max(||x||*||dec||, eps)
    rec_cos = xd * pl.reciprocal(jnp.maximum(x_norm * d_norm, 1e-8), approx=True)
    # relative_euclidean_distance: ||x-dec|| / clamp(||x||, min=1e-10)
    rec_euc = jnp.sqrt(dd) * pl.reciprocal(jnp.maximum(x_norm, 1e-10), approx=True)

    # ---- estimation net: Linear -> Tanh -> Dropout(eval) -> Linear -> Softmax
    # z @ W1^T is decomposed (enc block + two rank-1 terms), so no in-kernel
    # concat is needed to build z for the matmul.
    w1_t = w1_t_ref[...]                                         # (latent_dim, 10)
    pre1 = (jnp.dot(enc, w1_t[0:enc_dim, :],
                    preferred_element_type=jnp.float32)
            + rec_euc * w1_t[enc_dim:enc_dim + 1, :]
            + rec_cos * w1_t[enc_dim + 1:enc_dim + 2, :]
            + b1_ref[...])
    h = jnp.tanh(pre1)
    # TODO(synk): nn.Dropout(p=0.5) is identity in eval mode; training-mode
    # stochastic dropout is not implemented here.
    logits = jnp.dot(h, w2_t_ref[...],
                     preferred_element_type=jnp.float32) + b2_ref[...]
    m = jnp.max(logits, axis=1, keepdims=True)
    e = jnp.exp(logits - m)
    gamma = e * pl.reciprocal(jnp.sum(e, axis=1, keepdims=True), approx=True)

    # ---- pack [enc | rec_euc | rec_cos | gamma | 0-pad] into one lane-dense
    # (TN, out_width) slab, written with a single unmasked store.  Column
    # placement uses tiny MXU matmuls / rank-1 broadcasts built from iota so
    # no masked narrow column stores and no unaligned lane concat are needed.
    lane_e = jax.lax.broadcasted_iota(jnp.int32, (enc_dim, out_width), 1)
    row_e = jax.lax.broadcasted_iota(jnp.int32, (enc_dim, out_width), 0)
    place_enc = (lane_e == row_e).astype(jnp.float32)            # cols [0, enc_dim)

    lane_g = jax.lax.broadcasted_iota(jnp.int32, (n_gmm, out_width), 1)
    row_g = jax.lax.broadcasted_iota(jnp.int32, (n_gmm, out_width), 0)
    place_gamma = (lane_g == row_g + latent_dim).astype(jnp.float32)

    lane = jax.lax.broadcasted_iota(jnp.int32, (1, out_width), 1)
    oh_euc = (lane == enc_dim).astype(jnp.float32)               # col enc_dim
    oh_cos = (lane == enc_dim + 1).astype(jnp.float32)           # col enc_dim+1

    packed_ref[...] = (
        jnp.dot(enc, place_enc, preferred_element_type=jnp.float32)
        + jnp.dot(gamma, place_gamma, preferred_element_type=jnp.float32)
        + rec_euc * oh_euc
        + rec_cos * oh_cos)


def dagmm_forward(x, params, *, block_n=1024, io_dtype=jnp.float32):
    """Returns (enc, dec, z, gamma), matching DAGMMModule.forward.

    x: (N, D) already-flattened input; params: PyTorch-layout weights.
    """
    n, d = x.shape
    enc_dim = params["we"].shape[0]
    latent_dim = enc_dim + 2
    n_gmm = params["w2"].shape[0]
    # Lane-dense packed output slab: [enc | rec_euc | rec_cos | gamma | pad].
    out_width = 128 * pl.cdiv(latent_dim + n_gmm, 128)

    # Row tile: biggest tile <= block_n, multiple of 8 (a tile equal to the
    # full batch is also always legal per the block-shape rules).
    tn = n if n <= block_n else (block_n // 8) * 8
    grid = (pl.cdiv(n, tn),)

    # Glue: transpose (out, in) -> (in, out); biases -> (1, out) rows.  Only
    # the bandwidth-relevant tensors (x, AE weights) follow io_dtype; the tiny
    # estimation weights and all biases stay f32.
    args = (
        x.astype(io_dtype),
        params["we"].T.astype(io_dtype),
        params["be"].reshape(1, -1).astype(jnp.float32),
        params["wd"].T.astype(io_dtype),
        params["bd"].reshape(1, -1).astype(jnp.float32),
        params["w1"].T.astype(jnp.float32),
        params["b1"].reshape(1, -1).astype(jnp.float32),
        params["w2"].T.astype(jnp.float32),
        params["b2"].reshape(1, -1).astype(jnp.float32),
    )

    row_tile = lambda i: (i, 0)
    resident = lambda i: (0, 0)   # same block every step -> stays in VMEM
    in_specs = [pl.BlockSpec((tn, d), row_tile)] + [
        pl.BlockSpec(a.shape, resident) for a in args[1:]
    ]
    out_specs = (
        pl.BlockSpec((tn, d), row_tile),            # dec
        pl.BlockSpec((tn, out_width), row_tile),    # packed feature slab
    )
    out_shape = (
        jax.ShapeDtypeStruct((n, d), io_dtype),             # dec
        jax.ShapeDtypeStruct((n, out_width), jnp.float32),  # packed
    )

    dec, packed = pl.pallas_call(
        functools.partial(_dagmm_kernel, enc_dim=enc_dim, n_gmm=n_gmm,
                          out_width=out_width),
        grid=grid,
        in_specs=in_specs,
        out_specs=out_specs,
        out_shape=out_shape,
        compiler_params=pltpu.CompilerParams(
            dimension_semantics=("parallel",),   # shard row tiles across TCs
            vmem_limit_bytes=32 * 1024 * 1024),
    )(*args)

    enc = packed[:, :enc_dim]
    z = packed[:, :latent_dim]
    gamma = packed[:, latent_dim:latent_dim + n_gmm]
    return enc, dec, z, gamma


def _reference_forward(x, p):
    """Pure-JAX reference for correctness checking."""
    enc = jnp.tanh(x @ p["we"].T + p["be"])
    dec = enc @ p["wd"].T + p["bd"]
    x_norm = jnp.linalg.norm(x, axis=1)
    d_norm = jnp.linalg.norm(dec, axis=1)
    rec_cos = jnp.sum(x * dec, axis=1) / jnp.maximum(x_norm * d_norm, 1e-8)
    rec_euc = jnp.linalg.norm(x - dec, axis=1) / jnp.maximum(x_norm, 1e-10)
    z = jnp.concatenate([enc, rec_euc[:, None], rec_cos[:, None]], axis=1)
    h = jnp.tanh(z @ p["w1"].T + p["b1"])
    logits = h @ p["w2"].T + p["b2"]
    gamma = jax.nn.softmax(logits, axis=1)
    return enc, dec, z, gamma


def _init_linear(key, out_f, in_f):
    # PyTorch nn.Linear-style uniform(-1/sqrt(fan_in), 1/sqrt(fan_in)).
    kw, kb = jax.random.split(key)
    bound = 1.0 / jnp.sqrt(in_f)
    w = jax.random.uniform(kw, (out_f, in_f), jnp.float32, -bound, bound)
    b = jax.random.uniform(kb, (out_f,), jnp.float32, -bound, bound)
    return w, b


if __name__ == "__main__":
    # Small shapes consistent with the module: flattened input D=32, AE latent
    # enc_dim=4, latent_dim=6, n_gmm=3, batch N=256 tiled into two 128-row
    # tiles (exercises the grid / pipelining path).
    N, D = 256, 32
    ENC_DIM, N_GMM = 4, 3
    LATENT_DIM = ENC_DIM + 2

    root = jax.random.PRNGKey(0)
    kx, k1, k2, k3, k4 = jax.random.split(root, 5)
    x = jax.random.normal(kx, (N, D), jnp.float32)

    we, be = _init_linear(k1, ENC_DIM, D)        # autoencoder encoder
    wd, bd = _init_linear(k2, D, ENC_DIM)        # autoencoder decoder
    w1, b1 = _init_linear(k3, 10, LATENT_DIM)    # estimation Linear(latent,10)
    w2, b2 = _init_linear(k4, N_GMM, 10)         # estimation Linear(10,n_gmm)
    params = dict(we=we, be=be, wd=wd, bd=bd, w1=w1, b1=b1, w2=w2, b2=b2)

    # f32 I/O path.
    enc, dec, z, gamma = jax.block_until_ready(
        dagmm_forward(x, params, block_n=128))

    enc_r, dec_r, z_r, gamma_r = _reference_forward(x, params)
    for got, ref in ((enc, enc_r), (dec, dec_r), (z, z_r), (gamma, gamma_r)):
        assert got.shape == ref.shape and got.dtype == ref.dtype
        # Slightly loose vs exact-divide reference: divides use the EUP
        # approximate reciprocal (pl.reciprocal(approx=True)).
        assert jnp.allclose(got, ref, atol=5e-3, rtol=5e-3), "mismatch vs reference"

    # bf16 I/O path (halves HBM traffic of x read / dec write); loose parity
    # smoke test against the f32 reference.
    enc_b, dec_b, z_b, gamma_b = jax.block_until_ready(
        dagmm_forward(x, params, block_n=128, io_dtype=jnp.bfloat16))
    assert dec_b.dtype == jnp.bfloat16
    for got, ref in ((enc_b, enc_r), (dec_b.astype(jnp.float32), dec_r),
                     (z_b, z_r), (gamma_b, gamma_r)):
        assert got.shape == ref.shape
        assert jnp.allclose(got, ref, atol=1e-1, rtol=1e-1), "bf16 mismatch"

    print("KERNEL_OK")
</pallas_src>

<mosaic_0001>
module attributes {stable_mosaic.version = 11 : i64} {
  func.func @_dagmm_kernel(%arg0: i32, %arg1: memref<128x32xf32, #tpu.memory_space<vmem>>, %arg2: memref<32x4xf32, #tpu.memory_space<vmem>>, %arg3: memref<1x4xf32, #tpu.memory_space<vmem>>, %arg4: memref<4x32xf32, #tpu.memory_space<vmem>>, %arg5: memref<1x32xf32, #tpu.memory_space<vmem>>, %arg6: memref<6x10xf32, #tpu.memory_space<vmem>>, %arg7: memref<1x10xf32, #tpu.memory_space<vmem>>, %arg8: memref<10x3xf32, #tpu.memory_space<vmem>>, %arg9: memref<1x3xf32, #tpu.memory_space<vmem>>, %arg10: memref<128x32xf32, #tpu.memory_space<vmem>>, %arg11: memref<128x128xf32, #tpu.memory_space<vmem>>) attributes {dimension_semantics = [#tpu.dimension_semantics<parallel>], iteration_bounds = array<i64: 2>, scalar_prefetch = 0 : i64, scratch_operands = 0 : i64, tpu.core_type = #tpu.core_type<tc>, window_params = [{transform_indices = @transform_0, window_bounds = array<i64: 128, 32>}, {pipeline_mode = #tpu.pipeline_mode<synchronous>, transform_indices = @transform_1, window_bounds = array<i64: 32, 4>}, {pipeline_mode = #tpu.pipeline_mode<synchronous>, transform_indices = @transform_2, window_bounds = array<i64: 1, 4>}, {pipeline_mode = #tpu.pipeline_mode<synchronous>, transform_indices = @transform_3, window_bounds = array<i64: 4, 32>}, {pipeline_mode = #tpu.pipeline_mode<synchronous>, transform_indices = @transform_4, window_bounds = array<i64: 1, 32>}, {pipeline_mode = #tpu.pipeline_mode<synchronous>, transform_indices = @transform_5, window_bounds = array<i64: 6, 10>}, {pipeline_mode = #tpu.pipeline_mode<synchronous>, transform_indices = @transform_6, window_bounds = array<i64: 1, 10>}, {pipeline_mode = #tpu.pipeline_mode<synchronous>, transform_indices = @transform_7, window_bounds = array<i64: 10, 3>}, {pipeline_mode = #tpu.pipeline_mode<synchronous>, transform_indices = @transform_8, window_bounds = array<i64: 1, 3>}, {transform_indices = @transform_9, window_bounds = array<i64: 128, 32>}, {transform_indices = @transform_10, window_bounds = array<i64: 128, 128>}]} {
    %c0 = arith.constant 0 : index
    %c0_0 = arith.constant 0 : index
    %0 = vector.load %arg1[%c0, %c0_0] : memref<128x32xf32, #tpu.memory_space<vmem>>, vector<128x32xf32>
    %c0_1 = arith.constant 0 : index
    %c0_2 = arith.constant 0 : index
    %1 = vector.load %arg2[%c0_1, %c0_2] : memref<32x4xf32, #tpu.memory_space<vmem>>, vector<32x4xf32>
    %cst = arith.constant dense<0.000000e+00> : vector<128x4xf32>
    %2 = tpu.matmul %0, %1, %cst {dimension_numbers = #tpu.dot_dimension_numbers<[1], [0], [0], [1], [0, 0, 1, 1], [], []>} : vector<128x32xf32>, vector<32x4xf32>, vector<128x4xf32> -> vector<128x4xf32>
    %c0_3 = arith.constant 0 : index
    %c0_4 = arith.constant 0 : index
    %3 = vector.load %arg3[%c0_3, %c0_4] : memref<1x4xf32, #tpu.memory_space<vmem>>, vector<1x4xf32>
    %4 = vector.broadcast %3 : vector<1x4xf32> to vector<128x4xf32>
    %5 = arith.addf %2, %4 : vector<128x4xf32>
    %6 = math.tanh %5 : vector<128x4xf32>
    %c0_5 = arith.constant 0 : index
    %c0_6 = arith.constant 0 : index
    %7 = vector.load %arg4[%c0_5, %c0_6] : memref<4x32xf32, #tpu.memory_space<vmem>>, vector<4x32xf32>
    %cst_7 = arith.constant dense<0.000000e+00> : vector<128x32xf32>
    %8 = tpu.matmul %6, %7, %cst_7 {dimension_numbers = #tpu.dot_dimension_numbers<[1], [0], [0], [1], [0, 0, 1, 1], [], []>} : vector<128x4xf32>, vector<4x32xf32>, vector<128x32xf32> -> vector<128x32xf32>
    %c0_8 = arith.constant 0 : index
    %c0_9 = arith.constant 0 : index
    %9 = vector.load %arg5[%c0_8, %c0_9] : memref<1x32xf32, #tpu.memory_space<vmem>>, vector<1x32xf32>
    %10 = vector.broadcast %9 : vector<1x32xf32> to vector<128x32xf32>
    %11 = arith.addf %8, %10 : vector<128x32xf32>
    %c0_10 = arith.constant 0 : index
    %c0_11 = arith.constant 0 : index
    %12 = vector.load %arg10[%c0_10, %c0_11] : memref<128x32xf32, #tpu.memory_space<vmem>>, vector<128x32xf32>
    tpu.vector_store %arg10[%c0_10, %c0_11], %11 {strides = array<i32>} : memref<128x32xf32, #tpu.memory_space<vmem>>, vector<128x32xf32>,
    %c0_12 = arith.constant 0 : index
    %c0_13 = arith.constant 0 : index
    %13 = vector.load %arg1[%c0_12, %c0_13] : memref<128x32xf32, #tpu.memory_space<vmem>>, vector<128x32xf32>
    %14 = arith.mulf %13, %13 : vector<128x32xf32>
    %cst_14 = arith.constant dense<0.000000e+00> : vector<128xf32>
    %15 = vector.multi_reduction <add>, %14, %cst_14 [1] : vector<128x32xf32> to vector<128xf32>
    %16 = vector.shape_cast %15 : vector<128xf32> to vector<128x1xf32>
    %17 = arith.mulf %11, %11 : vector<128x32xf32>
    %cst_15 = arith.constant dense<0.000000e+00> : vector<128xf32>
    %18 = vector.multi_reduction <add>, %17, %cst_15 [1] : vector<128x32xf32> to vector<128xf32>
    %19 = vector.shape_cast %18 : vector<128xf32> to vector<128x1xf32>
    %20 = arith.mulf %13, %11 : vector<128x32xf32>
    %cst_16 = arith.constant dense<0.000000e+00> : vector<128xf32>
    %21 = vector.multi_reduction <add>, %20, %cst_16 [1] : vector<128x32xf32> to vector<128xf32>
    %22 = vector.shape_cast %21 : vector<128xf32> to vector<128x1xf32>
    %23 = arith.addf %16, %19 : vector<128x1xf32>
    %cst_17 = arith.constant 2.000000e+00 : f32
    %24 = vector.broadcast %cst_17 : f32 to vector<128x1xf32>
    %25 = arith.mulf %24, %22 : vector<128x1xf32>
    %26 = arith.subf %23, %25 : vector<128x1xf32>
    %cst_18 = arith.constant 0.000000e+00 : f32
    %27 = vector.broadcast %cst_18 : f32 to vector<128x1xf32>
    %28 = arith.maximumf %26, %27 : vector<128x1xf32>
    %29 = math.sqrt %16 : vector<128x1xf32>
    %30 = math.sqrt %19 : vector<128x1xf32>
    %31 = arith.mulf %29, %30 : vector<128x1xf32>
    %cst_19 = arith.constant 9.99999993E-9 : f32
    %32 = vector.broadcast %cst_19 : f32 to vector<128x1xf32>
    %33 = arith.maximumf %31, %32 : vector<128x1xf32>
    %34 = tpu.reciprocal %33 {approx = true} : vector<128x1xf32> -> vector<128x1xf32>
    %35 = arith.mulf %22, %34 : vector<128x1xf32>
    %36 = math.sqrt %28 : vector<128x1xf32>
    %cst_20 = arith.constant 1.000000e-10 : f32
    %37 = vector.broadcast %cst_20 : f32 to vector<128x1xf32>
    %38 = arith.maximumf %29, %37 : vector<128x1xf32>
    %39 = tpu.reciprocal %38 {approx = true} : vector<128x1xf32> -> vector<128x1xf32>
    %40 = arith.mulf %36, %39 : vector<128x1xf32>
    %c0_21 = arith.constant 0 : index
    %c0_22 = arith.constant 0 : index
    %41 = vector.load %arg6[%c0_21, %c0_22] : memref<6x10xf32, #tpu.memory_space<vmem>>, vector<6x10xf32>
    %42 = vector.extract_strided_slice %41 {offsets = [0, 0], sizes = [4, 10], strides = [1, 1]} : vector<6x10xf32> to vector<4x10xf32>
    %cst_23 = arith.constant dense<0.000000e+00> : vector<128x10xf32>
    %43 = tpu.matmul %6, %42, %cst_23 {dimension_numbers = #tpu.dot_dimension_numbers<[1], [0], [0], [1], [0, 0, 1, 1], [], []>} : vector<128x4xf32>, vector<4x10xf32>, vector<128x10xf32> -> vector<128x10xf32>
    %44 = vector.extract_strided_slice %41 {offsets = [4, 0], sizes = [1, 10], strides = [1, 1]} : vector<6x10xf32> to vector<1x10xf32>
    %45 = vector.broadcast %40 : vector<128x1xf32> to vector<128x10xf32>
    %46 = vector.broadcast %44 : vector<1x10xf32> to vector<128x10xf32>
    %47 = arith.mulf %45, %46 : vector<128x10xf32>
    %48 = arith.addf %43, %47 : vector<128x10xf32>
    %49 = vector.extract_strided_slice %41 {offsets = [5, 0], sizes = [1, 10], strides = [1, 1]} : vector<6x10xf32> to vector<1x10xf32>
    %50 = vector.broadcast %35 : vector<128x1xf32> to vector<128x10xf32>
    %51 = vector.broadcast %49 : vector<1x10xf32> to vector<128x10xf32>
    %52 = arith.mulf %50, %51 : vector<128x10xf32>
    %53 = arith.addf %48, %52 : vector<128x10xf32>
    %c0_24 = arith.constant 0 : index
    %c0_25 = arith.constant 0 : index
    %54 = vector.load %arg7[%c0_24, %c0_25] : memref<1x10xf32, #tpu.memory_space<vmem>>, vector<1x10xf32>
    %55 = vector.broadcast %54 : vector<1x10xf32> to vector<128x10xf32>
    %56 = arith.addf %53, %55 : vector<128x10xf32>
    %57 = math.tanh %56 : vector<128x10xf32>
    %c0_26 = arith.constant 0 : index
    %c0_27 = arith.constant 0 : index
    %58 = vector.load %arg8[%c0_26, %c0_27] : memref<10x3xf32, #tpu.memory_space<vmem>>, vector<10x3xf32>
    %cst_28 = arith.constant dense<0.000000e+00> : vector<128x3xf32>
    %59 = tpu.matmul %57, %58, %cst_28 {dimension_numbers = #tpu.dot_dimension_numbers<[1], [0], [0], [1], [0, 0, 1, 1], [], []>} : vector<128x10xf32>, vector<10x3xf32>, vector<128x3xf32> -> vector<128x3xf32>
    %c0_29 = arith.constant 0 : index
    %c0_30 = arith.constant 0 : index
    %60 = vector.load %arg9[%c0_29, %c0_30] : memref<1x3xf32, #tpu.memory_space<vmem>>, vector<1x3xf32>
    %61 = vector.broadcast %60 : vector<1x3xf32> to vector<128x3xf32>
    %62 = arith.addf %59, %61 : vector<128x3xf32>
    %cst_31 = arith.constant dense<0xFF800000> : vector<128xf32>
    %63 = vector.multi_reduction <maximumf>, %62, %cst_31 [1] : vector<128x3xf32> to vector<128xf32>
    %64 = vector.shape_cast %63 : vector<128xf32> to vector<128x1xf32>
    %65 = vector.broadcast %64 : vector<128x1xf32> to vector<128x3xf32>
    %66 = arith.subf %62, %65 : vector<128x3xf32>
    %67 = math.exp %66 : vector<128x3xf32>
    %cst_32 = arith.constant dense<0.000000e+00> : vector<128xf32>
    %68 = vector.multi_reduction <add>, %67, %cst_32 [1] : vector<128x3xf32> to vector<128xf32>
    %69 = vector.shape_cast %68 : vector<128xf32> to vector<128x1xf32>
    %70 = tpu.reciprocal %69 {approx = true} : vector<128x1xf32> -> vector<128x1xf32>
    %71 = vector.broadcast %70 : vector<128x1xf32> to vector<128x3xf32>
    %72 = arith.mulf %67, %71 : vector<128x3xf32>
    %73 = tpu.iota {dimensions = array<i32: 1>} : vector<4x128xi32>
    %74 = tpu.iota {dimensions = array<i32: 0>} : vector<4x128xi32>
    %75 = arith.cmpi eq, %73, %74 : vector<4x128xi32>
    %76 = arith.extui %75 : vector<4x128xi1> to vector<4x128xi32>
    %77 = arith.sitofp %76 : vector<4x128xi32> to vector<4x128xf32>
    %78 = tpu.iota {dimensions = array<i32: 1>} : vector<3x128xi32>
    %79 = tpu.iota {dimensions = array<i32: 0>} : vector<3x128xi32>
    %c6_i32 = arith.constant 6 : i32
    %80 = vector.broadcast %c6_i32 : i32 to vector<3x128xi32>
    %81 = arith.addi %79, %80 : vector<3x128xi32>
    %82 = arith.cmpi eq, %78, %81 : vector<3x128xi32>
    %83 = arith.extui %82 : vector<3x128xi1> to vector<3x128xi32>
    %84 = arith.sitofp %83 : vector<3x128xi32> to vector<3x128xf32>
    %85 = tpu.iota {dimensions = array<i32: 1>} : vector<1x128xi32>
    %c4_i32 = arith.constant 4 : i32
    %86 = vector.broadcast %c4_i32 : i32 to vector<1x128xi32>
    %87 = arith.cmpi eq, %85, %86 : vector<1x128xi32>
    %88 = arith.extui %87 : vector<1x128xi1> to vector<1x128xi32>
    %89 = arith.sitofp %88 : vector<1x128xi32> to vector<1x128xf32>
    %c5_i32 = arith.constant 5 : i32
    %90 = vector.broadcast %c5_i32 : i32 to vector<1x128xi32>
    %91 = arith.cmpi eq, %85, %90 : vector<1x128xi32>
    %92 = arith.extui %91 : vector<1x128xi1> to vector<1x128xi32>
    %93 = arith.sitofp %92 : vector<1x128xi32> to vector<1x128xf32>
    %cst_33 = arith.constant dense<0.000000e+00> : vector<128x128xf32>
    %94 = tpu.matmul %6, %77, %cst_33 {dimension_numbers = #tpu.dot_dimension_numbers<[1], [0], [0], [1], [0, 0, 1, 1], [], []>} : vector<128x4xf32>, vector<4x128xf32>, vector<128x128xf32> -> vector<128x128xf32>
    %cst_34 = arith.constant dense<0.000000e+00> : vector<128x128xf32>
    %95 = tpu.matmul %72, %84, %cst_34 {dimension_numbers = #tpu.dot_dimension_numbers<[1], [0], [0], [1], [0, 0, 1, 1], [], []>} : vector<128x3xf32>, vector<3x128xf32>, vector<128x128xf32> -> vector<128x128xf32>
    %96 = arith.addf %94, %95 : vector<128x128xf32>
    %97 = vector.broadcast %40 : vector<128x1xf32> to vector<128x128xf32>
    %98 = vector.broadcast %89 : vector<1x128xf32> to vector<128x128xf32>
    %99 = arith.mulf %97, %98 : vector<128x128xf32>
    %100 = arith.addf %96, %99 : vector<128x128xf32>
    %101 = vector.broadcast %35 : vector<128x1xf32> to vector<128x128xf32>
    %102 = vector.broadcast %93 : vector<1x128xf32> to vector<128x128xf32>
    %103 = arith.mulf %101, %102 : vector<128x128xf32>
    %104 = arith.addf %100, %103 : vector<128x128xf32>
    %c0_35 = arith.constant 0 : index
    %c0_36 = arith.constant 0 : index
    %105 = vector.load %arg11[%c0_35, %c0_36] : memref<128x128xf32, #tpu.memory_space<vmem>>, vector<128x128xf32>
    tpu.vector_store %arg11[%c0_35, %c0_36], %104 {strides = array<i32>} : memref<128x128xf32, #tpu.memory_space<vmem>>, vector<128x128xf32>,
    return
  }
  func.func @transform_0(%arg0: i32) -> (i32, i32) {
    %c0_i32 = arith.constant 0 : i32
    %c0_i32_0 = arith.constant 0 : i32
    return %arg0, %c0_i32 : i32, i32
  }
  func.func @transform_1(%arg0: i32) -> (i32, i32) {
    %c0_i32 = arith.constant 0 : i32
    %c0_i32_0 = arith.constant 0 : i32
    %c0_i32_1 = arith.constant 0 : i32
    return %c0_i32, %c0_i32_0 : i32, i32
  }
  func.func @transform_2(%arg0: i32) -> (i32, i32) {
    %c0_i32 = arith.constant 0 : i32
    %c0_i32_0 = arith.constant 0 : i32
    %c0_i32_1 = arith.constant 0 : i32
    return %c0_i32, %c0_i32_0 : i32, i32
  }
  func.func @transform_3(%arg0: i32) -> (i32, i32) {
    %c0_i32 = arith.constant 0 : i32
    %c0_i32_0 = arith.constant 0 : i32
    %c0_i32_1 = arith.constant 0 : i32
    return %c0_i32, %c0_i32_0 : i32, i32
  }
  func.func @transform_4(%arg0: i32) -> (i32, i32) {
    %c0_i32 = arith.constant 0 : i32
    %c0_i32_0 = arith.constant 0 : i32
    %c0_i32_1 = arith.constant 0 : i32
    return %c0_i32, %c0_i32_0 : i32, i32
  }
  func.func @transform_5(%arg0: i32) -> (i32, i32) {
    %c0_i32 = arith.constant 0 : i32
    %c0_i32_0 = arith.constant 0 : i32
    %c0_i32_1 = arith.constant 0 : i32
    return %c0_i32, %c0_i32_0 : i32, i32
  }
  func.func @transform_6(%arg0: i32) -> (i32, i32) {
    %c0_i32 = arith.constant 0 : i32
    %c0_i32_0 = arith.constant 0 : i32
    %c0_i32_1 = arith.constant 0 : i32
    return %c0_i32, %c0_i32_0 : i32, i32
  }
  func.func @transform_7(%arg0: i32) -> (i32, i32) {
    %c0_i32 = arith.constant 0 : i32
    %c0_i32_0 = arith.constant 0 : i32
    %c0_i32_1 = arith.constant 0 : i32
    return %c0_i32, %c0_i32_0 : i32, i32
  }
  func.func @transform_8(%arg0: i32) -> (i32, i32) {
    %c0_i32 = arith.constant 0 : i32
    %c0_i32_0 = arith.constant 0 : i32
    %c0_i32_1 = arith.constant 0 : i32
    return %c0_i32, %c0_i32_0 : i32, i32
  }
  func.func @transform_9(%arg0: i32) -> (i32, i32) {
    %c0_i32 = arith.constant 0 : i32
    %c0_i32_0 = arith.constant 0 : i32
    return %arg0, %c0_i32 : i32, i32
  }
  func.func @transform_10(%arg0: i32) -> (i32, i32) {
    %c0_i32 = arith.constant 0 : i32
    %c0_i32_0 = arith.constant 0 : i32
    return %arg0, %c0_i32 : i32, i32
  }
}

</mosaic_0001>

<llo_original>
// kernel: tpu_custom_call.1
$region0: #{tpu_custom_call.1}
  #allocation0 [shape = 'u32[]', space=smem, size = 0x4, offset = 0x4, fixed_abs, tag = 'smem constant byte address 0x4 - core index']
  #allocation1 [shape = 'u32[144,128]{1,0:T(1,128)}', space=vmem, size = 0x12000, scoped, tag = 'internal scratch']
  %s0 = inlined_call_operand.vmem [shape: f32[256,32], index: 0, kind: input, shape index: {}]
  %s1 = inlined_call_operand.vmem [shape: f32[32,4], index: 1, kind: input, shape index: {}]
  %s2 = inlined_call_operand.vmem [shape: f32[1,4], index: 2, kind: input, shape index: {}]
  %s3 = inlined_call_operand.vmem [shape: f32[4,32], index: 3, kind: input, shape index: {}]
  %s4 = inlined_call_operand.vmem [shape: f32[1,32], index: 4, kind: input, shape index: {}]
  %s5 = inlined_call_operand.vmem [shape: f32[6,10], index: 5, kind: input, shape index: {}]
  %s6 = inlined_call_operand.vmem [shape: f32[1,10], index: 6, kind: input, shape index: {}]
  %s7 = inlined_call_operand.vmem [shape: f32[10,3], index: 7, kind: input, shape index: {}]
  %s8 = inlined_call_operand.vmem [shape: f32[1,3], index: 8, kind: input, shape index: {}]
  %s9 = inlined_call_operand.vmem [shape: f32[256,32], index: 9, kind: output, shape index: {0}]
  %s10 = inlined_call_operand.hbm [shape: f32[256,128], index: 10, kind: output, shape index: {1}]
  %11 = xla_tuple %s9, %s10
  %s12 = sld [smem:[#allocation0]]
  $region77: #{tpu_custom_call.1} parent=0
    _
  %s14 = ssub.s32 1, %s12
  %s15 = scalar_select 0, %s14, %s12
  $region1: #{tpu_custom_call.1} parent=0
    #allocation2 [shape = 'u8[131072]{0}', space=vmem, size = 0x20000, scoped, tag = 'output window, operand 1']
    #allocation3 [shape = 's32[2]{0}', space=sflag, size = 0x8, scoped, tag = 'scoped memory for tpu_custom_call.1']
    %16 = vsyncpa [#allocation3], 0
    %s17 = scalar_lea.sflag [#allocation3], 1
    %18 = vsyncpa %s17, 0
    loop: start=0, step=1, limit=4
    $region2: #{tpu_custom_call.1} parent=1 // loop_pre_header
      _
    $region3: #{tpu_custom_call.1} parent=1 // loop_header
      %s20 = sphi 0, %s24
      %p21 = scmp.ge.s32.totalorder %s20, 4
      %s30 = sphi 0, %s32
      %s33 = sphi 0, %s30
      %s34 = sphi 0, %s33
      %s50 = sphi 0, %s34
      %s54 = sphi 0, %s54
      %s56 = sphi 0, %s54
      %s57 = sphi 0, %s56
      %s71 = sphi 0, %s57
      %s75 = sphi 0, %s75
      %s77 = sphi 0, %s75
      %s78 = sphi 0, %s77
      %s92 = sphi 0, %s78
      %s96 = sphi 0, %s96
      %s98 = sphi 0, %s96
      %s99 = sphi 0, %s98
      %s113 = sphi 0, %s99
      %s117 = sphi 0, %s117
      %s119 = sphi 0, %s117
      %s120 = sphi 0, %s119
      %s134 = sphi 0, %s120
      %s138 = sphi 0, %s138
      %s140 = sphi 0, %s138
      %s141 = sphi 0, %s140
      %s155 = sphi 0, %s141
      %s159 = sphi 0, %s159
      %s161 = sphi 0, %s159
      %s162 = sphi 0, %s161
      %s176 = sphi 0, %s162
      %s180 = sphi 0, %s180
      %s182 = sphi 0, %s180
      %s183 = sphi 0, %s182
      %s197 = sphi 0, %s183
      %s201 = sphi 0, %s201
      %s203 = sphi 0, %s201
      %s204 = sphi 0, %s203
      %s218 = sphi 0, %s204
      %s224 = sphi 0, %s226
      %s227 = sphi 0, %s224
      %s228 = sphi 0, %s227
      %s244 = sphi 0, %s228
      %s250 = sphi 0, %s252
      %s253 = sphi 0, %s250
      %s254 = sphi 0, %s253
      %s270 = sphi 0, %s254
    $region4: #{tpu_custom_call.1} parent=1 // loop_header_branch
      %23 = sbr.rel (%p21) target = $region8
    $region5: #{tpu_custom_call.1} parent=1 // loop_body
      %s25 = ssub.s32 %s20, 1
      %s26 = ssub.s32 %s20, 2
      %s27 = sadd.s32 %s20, 1
      %s28 = ssub.s32 %s20, %s27
      %p29 = scmp.eq.s32.totalorder %s28, 0
      %s31 = sadd.s32 %s30, 1
      %s32 = scalar_select %p29, %s30, %s31
      %p35 = pneg %p29
      %p36 = scmp.eq.s32.totalorder %s20, 1
      %p37 = por %p35, %p36
      %p38 = scmp.ne.s32.totalorder %s30, %s33
      %p39 = scmp.eq.s32.totalorder %s20, 0
      %p40 = por %p38, %p39
      %p41 = scmp.ne.s32.totalorder %s30, %s33
      %p42 = scmp.eq.s32.totalorder %s25, 1
      %p43 = por %p41, %p42
      %p44 = scmp.ne.s32.totalorder %s33, %s34
      %p45 = scmp.eq.s32.totalorder %s25, 0
      %p46 = por %p44, %p45
      %p47 = scmp.ne.s32.totalorder %s33, %s34
      %p48 = scmp.eq.s32.totalorder %s26, 1
      %p49 = por %p47, %p48
      %p51 = scmp.ne.s32.totalorder %s34, %s50
      %p52 = scmp.eq.s32.totalorder %s26, 0
      %p53 = por %p51, %p52
      %s55 = sadd.s32 %s54, 1
      %p58 = scmp.eq.s32.totalorder %s20, 1
      %p59 = scmp.ne.s32.totalorder %s54, %s56
      %p60 = scmp.eq.s32.totalorder %s20, 0
      %p61 = por %p59, %p60
      %p62 = scmp.ne.s32.totalorder %s54, %s56
      %p63 = scmp.eq.s32.totalorder %s25, 1
      %p64 = por %p62, %p63
      %p65 = scmp.ne.s32.totalorder %s56, %s57
      %p66 = scmp.eq.s32.totalorder %s25, 0
      %p67 = por %p65, %p66
      %p68 = scmp.ne.s32.totalorder %s56, %s57
      %p69 = scmp.eq.s32.totalorder %s26, 1
      %p70 = por %p68, %p69
      %p72 = scmp.ne.s32.totalorder %s57, %s71
      %p73 = scmp.eq.s32.totalorder %s26, 0
      %p74 = por %p72, %p73
      %s76 = sadd.s32 %s75, 1
      %p79 = scmp.eq.s32.totalorder %s20, 1
      %p80 = scmp.ne.s32.totalorder %s75, %s77
      %p81 = scmp.eq.s32.totalorder %s20, 0
      %p82 = por %p80, %p81
      %p83 = scmp.ne.s32.totalorder %s75, %s77
      %p84 = scmp.eq.s32.totalorder %s25, 1
      %p85 = por %p83, %p84
      %p86 = scmp.ne.s32.totalorder %s77, %s78
      %p87 = scmp.eq.s32.totalorder %s25, 0
      %p88 = por %p86, %p87
      %p89 = scmp.ne.s32.totalorder %s77, %s78
      %p90 = scmp.eq.s32.totalorder %s26, 1
      %p91 = por %p89, %p90
      %p93 = scmp.ne.s32.totalorder %s78, %s92
      %p94 = scmp.eq.s32.totalorder %s26, 0
      %p95 = por %p93, %p94
      %s97 = sadd.s32 %s96, 1
      %p100 = scmp.eq.s32.totalorder %s20, 1
      %p101 = scmp.ne.s32.totalorder %s96, %s98
      %p102 = scmp.eq.s32.totalorder %s20, 0
      %p103 = por %p101, %p102
      %p104 = scmp.ne.s32.totalorder %s96, %s98
      %p105 = scmp.eq.s32.totalorder %s25, 1
      %p106 = por %p104, %p105
      %p107 = scmp.ne.s32.totalorder %s98, %s99
      %p108 = scmp.eq.s32.totalorder %s25, 0
      %p109 = por %p107, %p108
      %p110 = scmp.ne.s32.totalorder %s98, %s99
      %p111 = scmp.eq.s32.totalorder %s26, 1
      %p112 = por %p110, %p111
      %p114 = scmp.ne.s32.totalorder %s99, %s113
      %p115 = scmp.eq.s32.totalorder %s26, 0
      %p116 = por %p114, %p115
      %s118 = sadd.s32 %s117, 1
      %p121 = scmp.eq.s32.totalorder %s20, 1
      %p122 = scmp.ne.s32.totalorder %s117, %s119
      %p123 = scmp.eq.s32.totalorder %s20, 0
      %p124 = por %p122, %p123
      %p125 = scmp.ne.s32.totalorder %s117, %s119
      %p126 = scmp.eq.s32.totalorder %s25, 1
      %p127 = por %p125, %p126
      %p128 = scmp.ne.s32.totalorder %s119, %s120
      %p129 = scmp.eq.s32.totalorder %s25, 0
      %p130 = por %p128, %p129
      %p131 = scmp.ne.s32.totalorder %s119, %s120
      %p132 = scmp.eq.s32.totalorder %s26, 1
      %p133 = por %p131, %p132
      %p135 = scmp.ne.s32.totalorder %s120, %s134
      %p136 = scmp.eq.s32.totalorder %s26, 0
      %p137 = por %p135, %p136
      %s139 = sadd.s32 %s138, 1
      %p142 = scmp.eq.s32.totalorder %s20, 1
      %p143 = scmp.ne.s32.totalorder %s138, %s140
      %p144 = scmp.eq.s32.totalorder %s20, 0
      %p145 = por %p143, %p144
      %p146 = scmp.ne.s32.totalorder %s138, %s140
      %p147 = scmp.eq.s32.totalorder %s25, 1
      %p148 = por %p146, %p147
      %p149 = scmp.ne.s32.totalorder %s140, %s141
      %p150 = scmp.eq.s32.totalorder %s25, 0
      %p151 = por %p149, %p150
      %p152 = scmp.ne.s32.totalorder %s140, %s141
      %p153 = scmp.eq.s32.totalorder %s26, 1
      %p154 = por %p152, %p153
      %p156 = scmp.ne.s32.totalorder %s141, %s155
      %p157 = scmp.eq.s32.totalorder %s26, 0
      %p158 = por %p156, %p157
      %s160 = sadd.s32 %s159, 1
      %p163 = scmp.eq.s32.totalorder %s20, 1
      %p164 = scmp.ne.s32.totalorder %s159, %s161
      %p165 = scmp.eq.s32.totalorder %s20, 0
      %p166 = por %p164, %p165
      %p167 = scmp.ne.s32.totalorder %s159, %s161
      %p168 = scmp.eq.s32.totalorder %s25, 1
      %p169 = por %p167, %p168
      %p170 = scmp.ne.s32.totalorder %s161, %s162
      %p171 = scmp.eq.s32.totalorder %s25, 0
      %p172 = por %p170, %p171
      %p173 = scmp.ne.s32.totalorder %s161, %s162
      %p174 = scmp.eq.s32.totalorder %s26, 1
      %p175 = por %p173, %p174
      %p177 = scmp.ne.s32.totalorder %s162, %s176
      %p178 = scmp.eq.s32.totalorder %s26, 0
      %p179 = por %p177, %p178
      %s181 = sadd.s32 %s180, 1
      %p184 = scmp.eq.s32.totalorder %s20, 1
      %p185 = scmp.ne.s32.totalorder %s180, %s182
      %p186 = scmp.eq.s32.totalorder %s20, 0
      %p187 = por %p185, %p186
      %p188 = scmp.ne.s32.totalorder %s180, %s182
      %p189 = scmp.eq.s32.totalorder %s25, 1
      %p190 = por %p188, %p189
      %p191 = scmp.ne.s32.totalorder %s182, %s183
      %p192 = scmp.eq.s32.totalorder %s25, 0
      %p193 = por %p191, %p192
      %p194 = scmp.ne.s32.totalorder %s182, %s183
      %p195 = scmp.eq.s32.totalorder %s26, 1
      %p196 = por %p194, %p195
      %p198 = scmp.ne.s32.totalorder %s183, %s197
      %p199 = scmp.eq.s32.totalorder %s26, 0
      %p200 = por %p198, %p199
      %s202 = sadd.s32 %s201, 1
      %p205 = scmp.eq.s32.totalorder %s20, 1
      %p206 = scmp.ne.s32.totalorder %s201, %s203
      %p207 = scmp.eq.s32.totalorder %s20, 0
      %p208 = por %p206, %p207
      %p209 = scmp.ne.s32.totalorder %s201, %s203
      %p210 = scmp.eq.s32.totalorder %s25, 1
      %p211 = por %p209, %p210
      %p212 = scmp.ne.s32.totalorder %s203, %s204
      %p213 = scmp.eq.s32.totalorder %s25, 0
      %p214 = por %p212, %p213
      %p215 = scmp.ne.s32.totalorder %s203, %s204
      %p216 = scmp.eq.s32.totalorder %s26, 1
      %p217 = por %p215, %p216
      %p219 = scmp.ne.s32.totalorder %s204, %s218
      %p220 = scmp.eq.s32.totalorder %s26, 0
      %p221 = por %p219, %p220
      %s222 = ssub.s32 %s20, %s27
      %p223 = scmp.eq.s32.totalorder %s222, 0
      %s225 = sadd.s32 %s224, 1
      %s226 = scalar_select %p223, %s224, %s225
      %p229 = pneg %p223
      %p230 = scmp.eq.s32.totalorder %s20, 1
      %p231 = por %p229, %p230
      %p232 = scmp.ne.s32.totalorder %s224, %s227
      %p233 = scmp.eq.s32.totalorder %s20, 0
      %p234 = por %p232, %p233
      %p235 = scmp.ne.s32.totalorder %s224, %s227
      %p236 = scmp.eq.s32.totalorder %s25, 1
      %p237 = por %p235, %p236
      %p238 = scmp.ne.s32.totalorder %s227, %s228
      %p239 = scmp.eq.s32.totalorder %s25, 0
      %p240 = por %p238, %p239
      %p241 = scmp.ne.s32.totalorder %s227, %s228
      %p242 = scmp.eq.s32.totalorder %s26, 1
      %p243 = por %p241, %p242
      %p245 = scmp.ne.s32.totalorder %s228, %s244
      %p246 = scmp.eq.s32.totalorder %s26, 0
      %p247 = por %p245, %p246
      %s248 = ssub.s32 %s20, %s27
      %p249 = scmp.eq.s32.totalorder %s248, 0
      %s251 = sadd.s32 %s250, 1
      %s252 = scalar_select %p249, %s250, %s251
      %p255 = pneg %p249
      %p256 = scmp.eq.s32.totalorder %s20, 1
      %p257 = por %p255, %p256
      %p258 = scmp.ne.s32.totalorder %s250, %s253
      %p259 = scmp.eq.s32.totalorder %s20, 0
      %p260 = por %p258, %p259
      %p261 = scmp.ne.s32.totalorder %s250, %s253
      %p262 = scmp.eq.s32.totalorder %s25, 1
      %p263 = por %p261, %p262
      %p264 = scmp.ne.s32.totalorder %s253, %s254
      %p265 = scmp.eq.s32.totalorder %s25, 0
      %p266 = por %p264, %p265
      %p267 = scmp.ne.s32.totalorder %s253, %s254
      %p268 = scmp.eq.s32.totalorder %s26, 1
      %p269 = por %p267, %p268
      %p271 = scmp.ne.s32.totalorder %s254, %s270
      %p272 = scmp.eq.s32.totalorder %s26, 0
      %p273 = por %p271, %p272
      %p274 = scmp.le.s32.totalorder 1, %s20
      %p275 = scmp.lt.s32.totalorder %s20, 3
      %p276 = pnand %p274, %p275
      %p277 = pneg %p276
      // Predicated region
      $region9: #{tpu_custom_call.1} parent=5 // pred_check
        _
      $region10: #{tpu_custom_call.1} parent=5 // pred_check_branch
        %279 = sbr.rel (%p276) target = $region12
      $region11: #{tpu_custom_call.1} parent=5 // pred_region
        %s280 = ssub.s32 %s20, 1
        // Predicated region
        $region13: #{tpu_custom_call.1} parent=11 // pred_check
          %p281 = pneg %p67
        $region14: #{tpu_custom_call.1} parent=11 // pred_check_branch
          %283 = sbr.rel (%p281) target = $region16
        $region15: #{tpu_custom_call.1} parent=11 // pred_region
          _
        $region16: #{tpu_custom_call.1} parent=11 // pred_fallthru
          _
        // Predicated region
        $region17: #{tpu_custom_call.1} parent=11 // pred_check
          %p284 = pneg %p88
        $region18: #{tpu_custom_call.1} parent=11 // pred_check_branch
          %286 = sbr.rel (%p284) target = $region20
        $region19: #{tpu_custom_call.1} parent=11 // pred_region
          _
        $region20: #{tpu_custom_call.1} parent=11 // pred_fallthru
          _
        // Predicated region
        $region21: #{tpu_custom_call.1} parent=11 // pred_check
          %p287 = pneg %p109
        $region22: #{tpu_custom_call.1} parent=11 // pred_check_branch
          %289 = sbr.rel (%p287) target = $region24
        $region23: #{tpu_custom_call.1} parent=11 // pred_region
          _
        $region24: #{tpu_custom_call.1} parent=11 // pred_fallthru
          _
        // Predicated region
        $region25: #{tpu_custom_call.1} parent=11 // pred_check
          %p290 = pneg %p130
        $region26: #{tpu_custom_call.1} parent=11 // pred_check_branch
          %292 = sbr.rel (%p290) target = $region28
        $region27: #{tpu_custom_call.1} parent=11 // pred_region
          _
        $region28: #{tpu_custom_call.1} parent=11 // pred_fallthru
          _
        // Predicated region
        $region29: #{tpu_custom_call.1} parent=11 // pred_check
          %p293 = pneg %p151
        $region30: #{tpu_custom_call.1} parent=11 // pred_check_branch
          %295 = sbr.rel (%p293) target = $region32
        $region31: #{tpu_custom_call.1} parent=11 // pred_region
          _
        $region32: #{tpu_custom_call.1} parent=11 // pred_fallthru
          _
        // Predicated region
        $region33: #{tpu_custom_call.1} parent=11 // pred_check
          %p296 = pneg %p172
        $region34: #{tpu_custom_call.1} parent=11 // pred_check_branch
          %298 = sbr.rel (%p296) target = $region36
        $region35: #{tpu_custom_call.1} parent=11 // pred_region
          _
        $region36: #{tpu_custom_call.1} parent=11 // pred_fallthru
          _
        // Predicated region
        $region37: #{tpu_custom_call.1} parent=11 // pred_check
          %p299 = pneg %p193
        $region38: #{tpu_custom_call.1} parent=11 // pred_check_branch
          %301 = sbr.rel (%p299) target = $region40
        $region39: #{tpu_custom_call.1} parent=11 // pred_region
          _
        $region40: #{tpu_custom_call.1} parent=11 // pred_fallthru
          _
        // Predicated region
        $region41: #{tpu_custom_call.1} parent=11 // pred_check
          %p302 = pneg %p214
        $region42: #{tpu_custom_call.1} parent=11 // pred_check_branch
          %304 = sbr.rel (%p302) target = $region44
        $region43: #{tpu_custom_call.1} parent=11 // pred_region
          _
        $region44: #{tpu_custom_call.1} parent=11 // pred_fallthru
          _
      $region12: #{tpu_custom_call.1} parent=5 // pred_fallthru
        _
      %p305 = scmp.lt.s32.totalorder %s20, 2
      // Predicated region
      $region45: #{tpu_custom_call.1} parent=5 // pred_check
        %p306 = pneg %p305
      $region46: #{tpu_custom_call.1} parent=5 // pred_check_branch
        %308 = sbr.rel (%p306) target = $region48
      $region47: #{tpu_custom_call.1} parent=5 // pred_region
        // Predicated region
        $region49: #{tpu_custom_call.1} parent=47 // pred_check
          %p309 = pneg %p40
        $region50: #{tpu_custom_call.1} parent=47 // pred_check_branch
          %311 = sbr.rel (%p309) target = $region52
        $region51: #{tpu_custom_call.1} parent=47 // pred_region
          %s312 = smul.u32 16, %s20
          %p313 = scmp.lt.s32.totalorder %s312, 31
          %s314 = scalar_select %p313, %s312, 31
          %s315 = smul.addr %s314, 8
          %s316 = scalar_lea.vmem %s0, %s315
          %s317 = smul.u32 16, %s20
        $region52: #{tpu_custom_call.1} parent=47 // pred_fallthru
          _
      $region48: #{tpu_custom_call.1} parent=5 // pred_fallthru
        _
      %p318 = scmp.le.s32.totalorder 1, %s20
      %p319 = scmp.lt.s32.totalorder %s20, 3
      %p320 = pnand %p318, %p319
      %p321 = pneg %p320
      // Predicated region
      $region53: #{tpu_custom_call.1} parent=5 // pred_check
        _
      $region54: #{tpu_custom_call.1} parent=5 // pred_check_branch
        %323 = sbr.rel (%p320) target = $region56
      $region55: #{tpu_custom_call.1} parent=5 // pred_region
        %s324 = ssub.s32 %s20, 1
        %s325 = smul.u32 16, %s25
        %p326 = scmp.lt.s32.totalorder %s325, 31
        %s327 = scalar_select %p326, %s325, 31
        %s328 = smul.addr %s327, 8
        %s329 = scalar_lea.vmem %s0, %s328
        %p330 = pneg %p46
        %p331 = pneg %p43
        %p332 = pneg %p67
        %p333 = pneg %p64
        %p334 = pneg %p88
        %p335 = pneg %p85
        %p336 = pneg %p109
        %p337 = pneg %p106
        %p338 = pneg %p130
        %p339 = pneg %p127
        %p340 = pneg %p151
        %p341 = pneg %p148
        %p342 = pneg %p172
        %p343 = pneg %p169
        %p344 = pneg %p193
        %p345 = pneg %p190
        %p346 = pneg %p214
        %p347 = pneg %p211
        %p348 = pneg %p240
        %p349 = pneg %p237
        %s350 = smul.u32 16, %s25
        %p351 = scmp.lt.s32.totalorder %s350, 31
        %s352 = scalar_select %p351, %s350, 31
        %s353 = smul.addr %s352, 8
        %s354 = scalar_lea.vmem %s9, %s353
        %p355 = pneg %p266
        %p356 = pneg %p263
        %s357 = sand.u32 %s253, 1
        %s358 = scalar_lea.sflag [#allocation3], %s357
        %s359 = sand.u32 %s253, 1
        %s360 = smul.addr %s359, 128
        %s361 = scalar_lea.vmem [#allocation2], %s360
        %s362 = smul.u32 16, %s25
        %p363 = scmp.lt.s32.totalorder %s362, 31
        %s364 = scalar_select %p363, %s362, 31
        %s365 = smul.addr %s364, 8
        %s366 = scalar_lea.vmem %s0, %s365
        %s367 = smul.u32 16, %s25
        %s368 = smul.u32 16, %s25
        %p369 = scmp.lt.s32.totalorder %s368, 31
        %s370 = scalar_select %p369, %s368, 31
        %s371 = smul.addr %s370, 8
        %s372 = scalar_lea.vmem %s9, %s371
        %s373 = smul.u32 16, %s25
        %s374 = smul.u32 16, %s25
        %v375 = vld [vmem:[%s366] sm:$0xff]
        %v376 = vld [vmem:[%s366 + $0x8] sm:$0xff]
        %v377 = vld [vmem:[%s366 + $0x10] sm:$0xff]
        %v378 = vld [vmem:[%s366 + $0x18] sm:$0xff]
        %v379 = vld [vmem:[%s366 + $0x20] sm:$0xff]
        %v380 = vld [vmem:[%s366 + $0x28] sm:$0xff]
        %v381 = vld [vmem:[%s366 + $0x30] sm:$0xff]
        %v382 = vld [vmem:[%s366 + $0x38] sm:$0xff]
        %v383 = vld [vmem:[%s366 + $0x40] sm:$0xff]
        %v384 = vld [vmem:[%s366 + $0x48] sm:$0xff]
        %v385 = vld [vmem:[%s366 + $0x50] sm:$0xff]
        %v386 = vld [vmem:[%s366 + $0x58] sm:$0xff]
        %v387 = vld [vmem:[%s366 + $0x60] sm:$0xff]
        %v388 = vld [vmem:[%s366 + $0x68] sm:$0xff]
        %v389 = vld [vmem:[%s366 + $0x70] sm:$0xff]
        %v390 = vld [vmem:[%s366 + $0x78] sm:$0xff]
        %v391 = vld [vmem:[%s1] sm:$0xff]
        %v392 = vld [vmem:[%s1 + $0x8] sm:$0xff]
        %v393 = vld [vmem:[%s1 + $0x10] sm:$0xff]
        %v394 = vld [vmem:[%s1 + $0x18] sm:$0xff]
        %v395 = vld [vmem:[%s2] sm:$0x1]
        %v397 = vlaneseq
        %v398 = vshrl.u32 %v397, 7
        %v399 = vsub.s32 0, %v398
        %v400 = vrot.slane %v395, %v399
        %vm402 = vcmask 261120
        %v404 = vsel %vm402, %v375, 0
        %v407 = vsel %vm402, %v376, 0
        %v410 = vsel %vm402, %v377, 0
        %v413 = vsel %vm402, %v378, 0
        %v416 = vsel %vm402, %v379, 0
        %v419 = vsel %vm402, %v380, 0
        %v422 = vsel %vm402, %v381, 0
        %v425 = vsel %vm402, %v382, 0
        %v428 = vsel %vm402, %v383, 0
        %v431 = vsel %vm402, %v384, 0
        %v434 = vsel %vm402, %v385, 0
        %v437 = vsel %vm402, %v386, 0
        %v440 = vsel %vm402, %v387, 0
        %v443 = vsel %vm402, %v388, 0
        %v446 = vsel %vm402, %v389, 0
        %v449 = vsel %vm402, %v390, 0
        %451 = vmatprep.subr.mxu0 0.0
        %452 = vmatpush1.msra.mxu0 %v391
        %453 = vmatprep.subr.mxu0 0.0
        %454 = vmatpush1.msra.mxu0 %v392
        %455 = vmatprep.subr.mxu0 0.0
        %456 = vmatpush1.msra.mxu0 %v393
        %457 = vmatprep.subr.mxu0 0.0
        %458 = vmatpush1.msra.mxu0 %v394
        %459 = vmatprep.subr.mxu0 0.0
        %460 = vmatpush1.msra.mxu0 0.0
        %461 = vmatprep.subr.mxu0 0.0
        %462 = vmatpush1.msra.mxu0 0.0
        %463 = vmatprep.subr.mxu0 0.0
        %464 = vmatpush1.msra.mxu0 0.0
        %465 = vmatprep.subr.mxu0 0.0
        %466 = vmatpush1.msra.mxu0 0.0
        %467 = vmatprep.subr.mxu0 0.0
        %468 = vmatpush1.msra.mxu0 0.0
        %469 = vmatprep.subr.mxu0 0.0
        %470 = vmatpush1.msra.mxu0 0.0
        %471 = vmatprep.subr.mxu0 0.0
        %472 = vmatpush1.msra.mxu0 0.0
        %473 = vmatprep.subr.mxu0 0.0
        %474 = vmatpush1.msra.mxu0 0.0
        %475 = vmatprep.subr.mxu0 0.0
        %476 = vmatpush1.msra.mxu0 0.0
        %477 = vmatprep.subr.mxu0 0.0
        %478 = vmatpush1.msra.mxu0 0.0
        %479 = vmatprep.subr.mxu0 0.0
        %480 = vmatpush1.msra.mxu0 0.0
        %481 = vmatprep.subr.mxu0 0.0
        %482 = vmatpush1.msra.mxu0 0.0
        %483 = vmatprep.subr.mxu0 0.0
        %484 = vmatpush1.msra.mxu0 0.0
        %485 = vmatprep.subr.mxu0 0.0
        %486 = vmatpush1.msra.mxu0 0.0
        %487 = vmatprep.subr.mxu0 0.0
        %488 = vmatpush1.msra.mxu0 0.0
        %489 = vmatprep.subr.mxu0 0.0
        %490 = vmatpush1.msra.mxu0 0.0
        %491 = vmatprep.subr.mxu0 0.0
        %492 = vmatpush1.msra.mxu0 0.0
        %493 = vmatprep.subr.mxu0 0.0
        %494 = vmatpush1.msra.mxu0 0.0
        %495 = vmatprep.subr.mxu0 0.0
        %496 = vmatpush1.msra.mxu0 0.0
        %497 = vmatprep.subr.mxu0 0.0
        %498 = vmatpush1.msra.mxu0 0.0
        %499 = vmatprep.subr.mxu0 0.0
        %500 = vmatpush1.msra.mxu0 0.0
        %501 = vmatprep.subr.mxu0 0.0
        %502 = vmatpush1.msra.mxu0 0.0
        %503 = vmatprep.subr.mxu0 0.0
        %504 = vmatpush1.msra.mxu0 0.0
        %505 = vmatprep.subr.mxu0 0.0
        %506 = vmatpush1.msra.mxu0 0.0
        %507 = vmatprep.subr.mxu0 0.0
        %508 = vmatpush1.msra.mxu0 0.0
        %509 = vmatprep.subr.mxu0 0.0
        %510 = vmatpush1.msra.mxu0 0.0
        %511 = vmatprep.subr.mxu0 0.0
        %512 = vmatpush1.msra.mxu0 0.0
        %513 = vmatprep.subr.mxu0 0.0
        %514 = vmatpush1.msra.mxu0 0.0
        %515 = vmatprep.mubr.f32.mxu0 0.0
        %516 = vmatmul.mubr.f32.gmra.mrb[0].mxu0 %v404
        %v517 = vpop.f32.mrb[0].mxu0
        %v518 = vadd.f32 %v400, %v517
        %v519 = vpop.f32.mrb[0].mxu0
        %520 = vmatprep.mubr.f32.mxu0 0.0
        %521 = vmatmul.mubr.f32.gmra.mrb[0].mxu0 %v407
        %v522 = vpop.f32.mrb[0].mxu0
        %v523 = vadd.f32 %v400, %v522
        %v524 = vpop.f32.mrb[0].mxu0
        %525 = vmatprep.mubr.f32.mxu0 0.0
        %526 = vmatmul.mubr.f32.gmra.mrb[0].mxu0 %v410
        %v527 = vpop.f32.mrb[0].mxu0
        %v528 = vadd.f32 %v400, %v527
        %v529 = vpop.f32.mrb[0].mxu0
        %530 = vmatprep.mubr.f32.mxu0 0.0
        %531 = vmatmul.mubr.f32.gmra.mrb[0].mxu0 %v413
        %v532 = vpop.f32.mrb[0].mxu0
        %v533 = vadd.f32 %v400, %v532
        %v534 = vpop.f32.mrb[0].mxu0
        %535 = vmatprep.mubr.f32.mxu0 0.0
        %536 = vmatmul.mubr.f32.gmra.mrb[0].mxu0 %v416
        %v537 = vpop.f32.mrb[0].mxu0
        %v538 = vadd.f32 %v400, %v537
        %v539 = vpop.f32.mrb[0].mxu0
        %540 = vmatprep.mubr.f32.mxu0 0.0
        %541 = vmatmul.mubr.f32.gmra.mrb[0].mxu0 %v419
        %v542 = vpop.f32.mrb[0].mxu0
        %v543 = vadd.f32 %v400, %v542
        %v544 = vpop.f32.mrb[0].mxu0
        %545 = vmatprep.mubr.f32.mxu0 0.0
        %546 = vmatmul.mubr.f32.gmra.mrb[0].mxu0 %v422
        %v547 = vpop.f32.mrb[0].mxu0
        %v548 = vadd.f32 %v400, %v547
        %v549 = vpop.f32.mrb[0].mxu0
        %550 = vmatprep.mubr.f32.mxu0 0.0
        %551 = vmatmul.mubr.f32.gmra.mrb[0].mxu0 %v425
        %v552 = vpop.f32.mrb[0].mxu0
        %v553 = vadd.f32 %v400, %v552
        %v554 = vpop.f32.mrb[0].mxu0
        %555 = vmatprep.mubr.f32.mxu0 0.0
        %556 = vmatmul.mubr.f32.gmra.mrb[0].mxu0 %v428
        %v557 = vpop.f32.mrb[0].mxu0
        %v558 = vadd.f32 %v400, %v557
        %v559 = vpop.f32.mrb[0].mxu0
        %560 = vmatprep.mubr.f32.mxu0 0.0
        %561 = vmatmul.mubr.f32.gmra.mrb[0].mxu0 %v431
        %v562 = vpop.f32.mrb[0].mxu0
        %v563 = vadd.f32 %v400, %v562
        %v564 = vpop.f32.mrb[0].mxu0
        %565 = vmatprep.mubr.f32.mxu0 0.0
        %566 = vmatmul.mubr.f32.gmra.mrb[0].mxu0 %v434
        %v567 = vpop.f32.mrb[0].mxu0
        %v568 = vadd.f32 %v400, %v567
        %v569 = vpop.f32.mrb[0].mxu0
        %570 = vmatprep.mubr.f32.mxu0 0.0
        %571 = vmatmul.mubr.f32.gmra.mrb[0].mxu0 %v437
        %v572 = vpop.f32.mrb[0].mxu0
        %v573 = vadd.f32 %v400, %v572
        %v574 = vpop.f32.mrb[0].mxu0
        %575 = vmatprep.mubr.f32.mxu0 0.0
        %576 = vmatmul.mubr.f32.gmra.mrb[0].mxu0 %v440
        %v577 = vpop.f32.mrb[0].mxu0
        %v578 = vadd.f32 %v400, %v577
        %v579 = vpop.f32.mrb[0].mxu0
        %580 = vmatprep.mubr.f32.mxu0 0.0
        %581 = vmatmul.mubr.f32.gmra.mrb[0].mxu0 %v443
        %v582 = vpop.f32.mrb[0].mxu0
        %v583 = vadd.f32 %v400, %v582
        %v584 = vpop.f32.mrb[0].mxu0
        %585 = vmatprep.mubr.f32.mxu0 0.0
        %586 = vmatmul.mubr.f32.gmra.mrb[0].mxu0 %v446
        %v587 = vpop.f32.mrb[0].mxu0
        %v588 = vadd.f32 %v400, %v587
        %v589 = vpop.f32.mrb[0].mxu0
        %590 = vmatprep.mubr.f32.mxu0 0.0
        %591 = vmatmul.mubr.f32.gmra.mrb[0].mxu0 %v449
        %v592 = vpop.f32.mrb[0].mxu0
        %v593 = vadd.f32 %v400, %v592
        %v594 = vpop.f32.mrb[0].mxu0
        %595 = vdwg.mxu0
        %v596 = vtanh.pop %v518
        %v597 = vtanh.pop %v523
        %v598 = vtanh.pop %v528
        %v599 = vtanh.pop %v533
        %v600 = vtanh.pop %v538
        %v601 = vtanh.pop %v543
        %v602 = vtanh.pop %v548
        %v603 = vtanh.pop %v553
        %v604 = vtanh.pop %v558
        %v605 = vtanh.pop %v563
        %v606 = vtanh.pop %v568
        %v607 = vtanh.pop %v573
        %v608 = vtanh.pop %v578
        %v609 = vtanh.pop %v583
        %v610 = vtanh.pop %v588
        %v611 = vtanh.pop %v593
        %v612 = vld [vmem:[%s3] sm:$0xf]
        %v613 = vld [vmem:[%s4] sm:$0x1]
        %v615 = vlaneseq
        %v616 = vshrl.u32 %v615, 7
        %v617 = vsub.s32 0, %v616
        %v618 = vrot.slane %v613, %v617
        %vm620 = vcmask 31744
        %v622 = vsel %vm620, %v596, 0
        %v625 = vsel %vm620, %v597, 0
        %v628 = vsel %vm620, %v598, 0
        %v631 = vsel %vm620, %v599, 0
        %v634 = vsel %vm620, %v600, 0
        %v637 = vsel %vm620, %v601, 0
        %v640 = vsel %vm620, %v602, 0
        %v643 = vsel %vm620, %v603, 0
        %v646 = vsel %vm620, %v604, 0
        %v649 = vsel %vm620, %v605, 0
        %v652 = vsel %vm620, %v606, 0
        %v655 = vsel %vm620, %v607, 0
        %v658 = vsel %vm620, %v608, 0
        %v661 = vsel %vm620, %v609, 0
        %v664 = vsel %vm620, %v610, 0
        %v667 = vsel %vm620, %v611, 0
        %vm669 = vcmask 1043456
        %v671 = vsel %vm669, %v612, 0
        %673 = vmatprep.subr.mxu0 0.0
        %674 = vmatpush1.msra.mxu0 %v671
        %675 = vmatprep.subr.mxu0 0.0
        %676 = vmatpush1.msra.mxu0 0.0
        %677 = vmatprep.subr.mxu0 0.0
        %678 = vmatpush1.msra.mxu0 0.0
        %679 = vmatprep.subr.mxu0 0.0
        %680 = vmatpush1.msra.mxu0 0.0
        %681 = vmatprep.subr.mxu0 0.0
        %682 = vmatpush1.msra.mxu0 0.0
        %683 = vmatprep.subr.mxu0 0.0
        %684 = vmatpush1.msra.mxu0 0.0
        %685 = vmatprep.subr.mxu0 0.0
        %686 = vmatpush1.msra.mxu0 0.0
        %687 = vmatprep.subr.mxu0 0.0
        %688 = vmatpush1.msra.mxu0 0.0
        %689 = vmatprep.subr.mxu0 0.0
        %690 = vmatpush1.msra.mxu0 0.0
        %691 = vmatprep.subr.mxu0 0.0
        %692 = vmatpush1.msra.mxu0 0.0
        %693 = vmatprep.subr.mxu0 0.0
        %694 = vmatpush1.msra.mxu0 0.0
        %695 = vmatprep.subr.mxu0 0.0
        %696 = vmatpush1.msra.mxu0 0.0
        %697 = vmatprep.subr.mxu0 0.0
        %698 = vmatpush1.msra.mxu0 0.0
        %699 = vmatprep.subr.mxu0 0.0
        %700 = vmatpush1.msra.mxu0 0.0
        %701 = vmatprep.subr.mxu0 0.0
        %702 = vmatpush1.msra.mxu0 0.0
        %703 = vmatprep.subr.mxu0 0.0
        %704 = vmatpush1.msra.mxu0 0.0
        %705 = vmatprep.subr.mxu0 0.0
        %706 = vmatpush1.msra.mxu0 0.0
        %707 = vmatprep.subr.mxu0 0.0
        %708 = vmatpush1.msra.mxu0 0.0
        %709 = vmatprep.subr.mxu0 0.0
        %710 = vmatpush1.msra.mxu0 0.0
        %711 = vmatprep.subr.mxu0 0.0
        %712 = vmatpush1.msra.mxu0 0.0
        %713 = vmatprep.subr.mxu0 0.0
        %714 = vmatpush1.msra.mxu0 0.0
        %715 = vmatprep.subr.mxu0 0.0
        %716 = vmatpush1.msra.mxu0 0.0
        %717 = vmatprep.subr.mxu0 0.0
        %718 = vmatpush1.msra.mxu0 0.0
        %719 = vmatprep.subr.mxu0 0.0
        %720 = vmatpush1.msra.mxu0 0.0
        %721 = vmatprep.subr.mxu0 0.0
        %722 = vmatpush1.msra.mxu0 0.0
        %723 = vmatprep.subr.mxu0 0.0
        %724 = vmatpush1.msra.mxu0 0.0
        %725 = vmatprep.subr.mxu0 0.0
        %726 = vmatpush1.msra.mxu0 0.0
        %727 = vmatprep.subr.mxu0 0.0
        %728 = vmatpush1.msra.mxu0 0.0
        %729 = vmatprep.subr.mxu0 0.0
        %730 = vmatpush1.msra.mxu0 0.0
        %731 = vmatprep.subr.mxu0 0.0
        %732 = vmatpush1.msra.mxu0 0.0
        %733 = vmatprep.subr.mxu0 0.0
        %734 = vmatpush1.msra.mxu0 0.0
        %735 = vmatprep.subr.mxu0 0.0
        %736 = vmatpush1.msra.mxu0 0.0
        %737 = vmatprep.mubr.f32.mxu0 0.0
        %738 = vmatmul.mubr.f32.gmra.mrb[0].mxu0 %v622
        %v739 = vpop.f32.mrb[0].mxu0
        %v740 = vadd.f32 %v618, %v739
        %v741 = vpop.f32.mrb[0].mxu0
        %742 = vmatprep.mubr.f32.mxu0 0.0
        %743 = vmatmul.mubr.f32.gmra.mrb[0].mxu0 %v625
        %v744 = vpop.f32.mrb[0].mxu0
        %v745 = vadd.f32 %v618, %v744
        %v746 = vpop.f32.mrb[0].mxu0
        %747 = vmatprep.mubr.f32.mxu0 0.0
        %748 = vmatmul.mubr.f32.gmra.mrb[0].mxu0 %v628
        %v749 = vpop.f32.mrb[0].mxu0
        %v750 = vadd.f32 %v618, %v749
        %v751 = vpop.f32.mrb[0].mxu0
        %752 = vmatprep.mubr.f32.mxu0 0.0
        %753 = vmatmul.mubr.f32.gmra.mrb[0].mxu0 %v631
        %v754 = vpop.f32.mrb[0].mxu0
        %v755 = vadd.f32 %v618, %v754
        %v756 = vpop.f32.mrb[0].mxu0
        %757 = vmatprep.mubr.f32.mxu0 0.0
        %758 = vmatmul.mubr.f32.gmra.mrb[0].mxu0 %v634
        %v759 = vpop.f32.mrb[0].mxu0
        %v760 = vadd.f32 %v618, %v759
        %v761 = vpop.f32.mrb[0].mxu0
        %762 = vmatprep.mubr.f32.mxu0 0.0
        %763 = vmatmul.mubr.f32.gmra.mrb[0].mxu0 %v637
        %v764 = vpop.f32.mrb[0].mxu0
        %v765 = vadd.f32 %v618, %v764
        %v766 = vpop.f32.mrb[0].mxu0
        %767 = vmatprep.mubr.f32.mxu0 0.0
        %768 = vmatmul.mubr.f32.gmra.mrb[0].mxu0 %v640
        %v769 = vpop.f32.mrb[0].mxu0
        %v770 = vadd.f32 %v618, %v769
        %v771 = vpop.f32.mrb[0].mxu0
        %772 = vmatprep.mubr.f32.mxu0 0.0
        %773 = vmatmul.mubr.f32.gmra.mrb[0].mxu0 %v643
        %v774 = vpop.f32.mrb[0].mxu0
        %v775 = vadd.f32 %v618, %v774
        %v776 = vpop.f32.mrb[0].mxu0
        %777 = vmatprep.mubr.f32.mxu0 0.0
        %778 = vmatmul.mubr.f32.gmra.mrb[0].mxu0 %v646
        %v779 = vpop.f32.mrb[0].mxu0
        %v780 = vadd.f32 %v618, %v779
        %v781 = vpop.f32.mrb[0].mxu0
        %782 = vmatprep.mubr.f32.mxu0 0.0
        %783 = vmatmul.mubr.f32.gmra.mrb[0].mxu0 %v649
        %v784 = vpop.f32.mrb[0].mxu0
        %v785 = vadd.f32 %v618, %v784
        %v786 = vpop.f32.mrb[0].mxu0
        %787 = vmatprep.mubr.f32.mxu0 0.0
        %788 = vmatmul.mubr.f32.gmra.mrb[0].mxu0 %v652
        %v789 = vpop.f32.mrb[0].mxu0
        %v790 = vadd.f32 %v618, %v789
        %v791 = vpop.f32.mrb[0].mxu0
        %792 = vmatprep.mubr.f32.mxu0 0.0
        %793 = vmatmul.mubr.f32.gmra.mrb[0].mxu0 %v655
        %v794 = vpop.f32.mrb[0].mxu0
        %v795 = vadd.f32 %v618, %v794
        %v796 = vpop.f32.mrb[0].mxu0
        %797 = vmatprep.mubr.f32.mxu0 0.0
        %798 = vmatmul.mubr.f32.gmra.mrb[0].mxu0 %v658
        %v799 = vpop.f32.mrb[0].mxu0
        %v800 = vadd.f32 %v618, %v799
        %v801 = vpop.f32.mrb[0].mxu0
        %802 = vmatprep.mubr.f32.mxu0 0.0
        %803 = vmatmul.mubr.f32.gmra.mrb[0].mxu0 %v661
        %v804 = vpop.f32.mrb[0].mxu0
        %v805 = vadd.f32 %v618, %v804
        %v806 = vpop.f32.mrb[0].mxu0
        %807 = vmatprep.mubr.f32.mxu0 0.0
        %808 = vmatmul.mubr.f32.gmra.mrb[0].mxu0 %v664
        %v809 = vpop.f32.mrb[0].mxu0
        %v810 = vadd.f32 %v618, %v809
        %v811 = vpop.f32.mrb[0].mxu0
        %812 = vmatprep.mubr.f32.mxu0 0.0
        %813 = vmatmul.mubr.f32.gmra.mrb[0].mxu0 %v667
        %v814 = vpop.f32.mrb[0].mxu0
        %v815 = vadd.f32 %v618, %v814
        %v816 = vpop.f32.mrb[0].mxu0
        %817 = vdwg.mxu0
        %818 = vst.msk [vmem:[%s372] sm:$0xff] %vm402, %v740
        %819 = vst.msk [vmem:[%s372 + $0x8] sm:$0xff] %vm402, %v745
        %820 = vst.msk [vmem:[%s372 + $0x10] sm:$0xff] %vm402, %v750
        %821 = vst.msk [vmem:[%s372 + $0x18] sm:$0xff] %vm402, %v755
        %822 = vst.msk [vmem:[%s372 + $0x20] sm:$0xff] %vm402, %v760
        %823 = vst.msk [vmem:[%s372 + $0x28] sm:$0xff] %vm402, %v765
        %824 = vst.msk [vmem:[%s372 + $0x30] sm:$0xff] %vm402, %v770
        %825 = vst.msk [vmem:[%s372 + $0x38] sm:$0xff] %vm402, %v775
        %826 = vst.msk [vmem:[%s372 + $0x40] sm:$0xff] %vm402, %v780
        %827 = vst.msk [vmem:[%s372 + $0x48] sm:$0xff] %vm402, %v785
        %828 = vst.msk [vmem:[%s372 + $0x50] sm:$0xff] %vm402, %v790
        %829 = vst.msk [vmem:[%s372 + $0x58] sm:$0xff] %vm402, %v795
        %830 = vst.msk [vmem:[%s372 + $0x60] sm:$0xff] %vm402, %v800
        %831 = vst.msk [vmem:[%s372 + $0x68] sm:$0xff] %vm402, %v805
        %832 = vst.msk [vmem:[%s372 + $0x70] sm:$0xff] %vm402, %v810
        %833 = vst.msk [vmem:[%s372 + $0x78] sm:$0xff] %vm402, %v815
        %v834 = vld [vmem:[%s366] sm:$0xff]
        %v835 = vld [vmem:[%s366 + $0x8] sm:$0xff]
        %v836 = vld [vmem:[%s366 + $0x10] sm:$0xff]
        %v837 = vld [vmem:[%s366 + $0x18] sm:$0xff]
        %v838 = vld [vmem:[%s366 + $0x20] sm:$0xff]
        %v839 = vld [vmem:[%s366 + $0x28] sm:$0xff]
        %v840 = vld [vmem:[%s366 + $0x30] sm:$0xff]
        %v841 = vld [vmem:[%s366 + $0x38] sm:$0xff]
        %v842 = vld [vmem:[%s366 + $0x40] sm:$0xff]
        %v843 = vld [vmem:[%s366 + $0x48] sm:$0xff]
        %v844 = vld [vmem:[%s366 + $0x50] sm:$0xff]
        %v845 = vld [vmem:[%s366 + $0x58] sm:$0xff]
        %v846 = vld [vmem:[%s366 + $0x60] sm:$0xff]
        %v847 = vld [vmem:[%s366 + $0x68] sm:$0xff]
        %v848 = vld [vmem:[%s366 + $0x70] sm:$0xff]
        %v849 = vld [vmem:[%s366 + $0x78] sm:$0xff]
        %v850 = vmul.f32 %v834, %v834
        %v851 = vmul.f32 %v835, %v835
        %v852 = vmul.f32 %v836, %v836
        %v853 = vmul.f32 %v837, %v837
        %v854 = vmul.f32 %v838, %v838
        %v855 = vmul.f32 %v839, %v839
        %v856 = vmul.f32 %v840, %v840
        %v857 = vmul.f32 %v841, %v841
        %v858 = vmul.f32 %v842, %v842
        %v859 = vmul.f32 %v843, %v843
        %v860 = vmul.f32 %v844, %v844
        %v861 = vmul.f32 %v845, %v845
        %v862 = vmul.f32 %v846, %v846
        %v863 = vmul.f32 %v847, %v847
        %v864 = vmul.f32 %v848, %v848
        %v865 = vmul.f32 %v849, %v849
        %v866 = vsel %vm402, %v850, 0.0
        %867 = vadd.xlane.f32.xlu0 %v866
        %v868 = vpop.xlane.xlu0 %867
        %v869 = vsel %vm402, %v851, 0.0
        %870 = vadd.xlane.f32.xlu0 %v869
        %v871 = vpop.xlane.xlu0 %870
        %v872 = vsel %vm402, %v852, 0.0
        %873 = vadd.xlane.f32.xlu0 %v872
        %v874 = vpop.xlane.xlu0 %873
        %v875 = vsel %vm402, %v853, 0.0
        %876 = vadd.xlane.f32.xlu0 %v875
        %v877 = vpop.xlane.xlu0 %876
        %v878 = vsel %vm402, %v854, 0.0
        %879 = vadd.xlane.f32.xlu0 %v878
        %v880 = vpop.xlane.xlu0 %879
        %v881 = vsel %vm402, %v855, 0.0
        %882 = vadd.xlane.f32.xlu0 %v881
        %v883 = vpop.xlane.xlu0 %882
        %v884 = vsel %vm402, %v856, 0.0
        %885 = vadd.xlane.f32.xlu0 %v884
        %v886 = vpop.xlane.xlu0 %885
        %v887 = vsel %vm402, %v857, 0.0
        %888 = vadd.xlane.f32.xlu0 %v887
        %v889 = vpop.xlane.xlu0 %888
        %v890 = vsel %vm402, %v858, 0.0
        %891 = vadd.xlane.f32.xlu0 %v890
        %v892 = vpop.xlane.xlu0 %891
        %v893 = vsel %vm402, %v859, 0.0
        %894 = vadd.xlane.f32.xlu0 %v893
        %v895 = vpop.xlane.xlu0 %894
        %v896 = vsel %vm402, %v860, 0.0
        %897 = vadd.xlane.f32.xlu0 %v896
        %v898 = vpop.xlane.xlu0 %897
        %v899 = vsel %vm402, %v861, 0.0
        %900 = vadd.xlane.f32.xlu0 %v899
        %v901 = vpop.xlane.xlu0 %900
        %v902 = vsel %vm402, %v862, 0.0
        %903 = vadd.xlane.f32.xlu0 %v902
        %v904 = vpop.xlane.xlu0 %903
        %v905 = vsel %vm402, %v863, 0.0
        %906 = vadd.xlane.f32.xlu0 %v905
        %v907 = vpop.xlane.xlu0 %906
        %v908 = vsel %vm402, %v864, 0.0
        %909 = vadd.xlane.f32.xlu0 %v908
        %v910 = vpop.xlane.xlu0 %909
        %v911 = vsel %vm402, %v865, 0.0
        %912 = vadd.xlane.f32.xlu0 %v911
        %v913 = vpop.xlane.xlu0 %912
        %v914 = vmul.f32 %v740, %v740
        %v915 = vmul.f32 %v745, %v745
        %v916 = vmul.f32 %v750, %v750
        %v917 = vmul.f32 %v755, %v755
        %v918 = vmul.f32 %v760, %v760
        %v919 = vmul.f32 %v765, %v765
        %v920 = vmul.f32 %v770, %v770
        %v921 = vmul.f32 %v775, %v775
        %v922 = vmul.f32 %v780, %v780
        %v923 = vmul.f32 %v785, %v785
        %v924 = vmul.f32 %v790, %v790
        %v925 = vmul.f32 %v795, %v795
        %v926 = vmul.f32 %v800, %v800
        %v927 = vmul.f32 %v805, %v805
        %v928 = vmul.f32 %v810, %v810
        %v929 = vmul.f32 %v815, %v815
        %v930 = vsel %vm402, %v914, 0.0
        %931 = vadd.xlane.f32.xlu0 %v930
        %v932 = vpop.xlane.xlu0 %931
        %v933 = vsel %vm402, %v915, 0.0
        %934 = vadd.xlane.f32.xlu0 %v933
        %v935 = vpop.xlane.xlu0 %934
        %v936 = vsel %vm402, %v916, 0.0
        %937 = vadd.xlane.f32.xlu0 %v936
        %v938 = vpop.xlane.xlu0 %937
        %v939 = vsel %vm402, %v917, 0.0
        %940 = vadd.xlane.f32.xlu0 %v939
        %v941 = vpop.xlane.xlu0 %940
        %v942 = vsel %vm402, %v918, 0.0
        %943 = vadd.xlane.f32.xlu0 %v942
        %v944 = vpop.xlane.xlu0 %943
        %v945 = vsel %vm402, %v919, 0.0
        %946 = vadd.xlane.f32.xlu0 %v945
        %v947 = vpop.xlane.xlu0 %946
        %v948 = vsel %vm402, %v920, 0.0
        %949 = vadd.xlane.f32.xlu0 %v948
        %v950 = vpop.xlane.xlu0 %949
        %v951 = vsel %vm402, %v921, 0.0
        %952 = vadd.xlane.f32.xlu0 %v951
        %v953 = vpop.xlane.xlu0 %952
        %v954 = vsel %vm402, %v922, 0.0
        %955 = vadd.xlane.f32.xlu0 %v954
        %v956 = vpop.xlane.xlu0 %955
        %v957 = vsel %vm402, %v923, 0.0
        %958 = vadd.xlane.f32.xlu0 %v957
        %v959 = vpop.xlane.xlu0 %958
        %v960 = vsel %vm402, %v924, 0.0
        %961 = vadd.xlane.f32.xlu0 %v960
        %v962 = vpop.xlane.xlu0 %961
        %v963 = vsel %vm402, %v925, 0.0
        %964 = vadd.xlane.f32.xlu0 %v963
        %v965 = vpop.xlane.xlu0 %964
        %v966 = vsel %vm402, %v926, 0.0
        %967 = vadd.xlane.f32.xlu0 %v966
        %v968 = vpop.xlane.xlu0 %967
        %v969 = vsel %vm402, %v927, 0.0
        %970 = vadd.xlane.f32.xlu0 %v969
        %v971 = vpop.xlane.xlu0 %970
        %v972 = vsel %vm402, %v928, 0.0
        %973 = vadd.xlane.f32.xlu0 %v972
        %v974 = vpop.xlane.xlu0 %973
        %v975 = vsel %vm402, %v929, 0.0
        %976 = vadd.xlane.f32.xlu0 %v975
        %v977 = vpop.xlane.xlu0 %976
        %v978 = vmul.f32 %v834, %v740
        %v979 = vmul.f32 %v835, %v745
        %v980 = vmul.f32 %v836, %v750
        %v981 = vmul.f32 %v837, %v755
        %v982 = vmul.f32 %v838, %v760
        %v983 = vmul.f32 %v839, %v765
        %v984 = vmul.f32 %v840, %v770
        %v985 = vmul.f32 %v841, %v775
        %v986 = vmul.f32 %v842, %v780
        %v987 = vmul.f32 %v843, %v785
        %v988 = vmul.f32 %v844, %v790
        %v989 = vmul.f32 %v845, %v795
        %v990 = vmul.f32 %v846, %v800
        %v991 = vmul.f32 %v847, %v805
        %v992 = vmul.f32 %v848, %v810
        %v993 = vmul.f32 %v849, %v815
        %v994 = vsel %vm402, %v978, 0.0
        %995 = vadd.xlane.f32.xlu0 %v994
        %v996 = vpop.xlane.xlu0 %995
        %v997 = vsel %vm402, %v979, 0.0
        %998 = vadd.xlane.f32.xlu0 %v997
        %v999 = vpop.xlane.xlu0 %998
        %v1000 = vsel %vm402, %v980, 0.0
        %1001 = vadd.xlane.f32.xlu0 %v1000
        %v1002 = vpop.xlane.xlu0 %1001
        %v1003 = vsel %vm402, %v981, 0.0
        %1004 = vadd.xlane.f32.xlu0 %v1003
        %v1005 = vpop.xlane.xlu0 %1004
        %v1006 = vsel %vm402, %v982, 0.0
        %1007 = vadd.xlane.f32.xlu0 %v1006
        %v1008 = vpop.xlane.xlu0 %1007
        %v1009 = vsel %vm402, %v983, 0.0
        %1010 = vadd.xlane.f32.xlu0 %v1009
        %v1011 = vpop.xlane.xlu0 %1010
        %v1012 = vsel %vm402, %v984, 0.0
        %1013 = vadd.xlane.f32.xlu0 %v1012
        %v1014 = vpop.xlane.xlu0 %1013
        %v1015 = vsel %vm402, %v985, 0.0
        %1016 = vadd.xlane.f32.xlu0 %v1015
        %v1017 = vpop.xlane.xlu0 %1016
        %v1018 = vsel %vm402, %v986, 0.0
        %1019 = vadd.xlane.f32.xlu0 %v1018
        %v1020 = vpop.xlane.xlu0 %1019
        %v1021 = vsel %vm402, %v987, 0.0
        %1022 = vadd.xlane.f32.xlu0 %v1021
        %v1023 = vpop.xlane.xlu0 %1022
        %v1024 = vsel %vm402, %v988, 0.0
        %1025 = vadd.xlane.f32.xlu0 %v1024
        %v1026 = vpop.xlane.xlu0 %1025
        %v1027 = vsel %vm402, %v989, 0.0
        %1028 = vadd.xlane.f32.xlu0 %v1027
        %v1029 = vpop.xlane.xlu0 %1028
        %v1030 = vsel %vm402, %v990, 0.0
        %1031 = vadd.xlane.f32.xlu0 %v1030
        %v1032 = vpop.xlane.xlu0 %1031
        %v1033 = vsel %vm402, %v991, 0.0
        %1034 = vadd.xlane.f32.xlu0 %v1033
        %v1035 = vpop.xlane.xlu0 %1034
        %v1036 = vsel %vm402, %v992, 0.0
        %1037 = vadd.xlane.f32.xlu0 %v1036
        %v1038 = vpop.xlane.xlu0 %1037
        %v1039 = vsel %vm402, %v993, 0.0
        %1040 = vadd.xlane.f32.xlu0 %v1039
        %v1041 = vpop.xlane.xlu0 %1040
        %v1042 = vadd.f32 %v868, %v932
        %v1043 = vadd.f32 %v871, %v935
        %v1044 = vadd.f32 %v874, %v938
        %v1045 = vadd.f32 %v877, %v941
        %v1046 = vadd.f32 %v880, %v944
        %v1047 = vadd.f32 %v883, %v947
        %v1048 = vadd.f32 %v886, %v950
        %v1049 = vadd.f32 %v889, %v953
        %v1050 = vadd.f32 %v892, %v956
        %v1051 = vadd.f32 %v895, %v959
        %v1052 = vadd.f32 %v898, %v962
        %v1053 = vadd.f32 %v901, %v965
        %v1054 = vadd.f32 %v904, %v968
        %v1055 = vadd.f32 %v907, %v971
        %v1056 = vadd.f32 %v910, %v974
        %v1057 = vadd.f32 %v913, %v977
        %v1058 = vmul.f32 %v996, 2.0
        %v1059 = vmul.f32 %v999, 2.0
        %v1060 = vmul.f32 %v1002, 2.0
        %v1061 = vmul.f32 %v1005, 2.0
        %v1062 = vmul.f32 %v1008, 2.0
        %v1063 = vmul.f32 %v1011, 2.0
        %v1064 = vmul.f32 %v1014, 2.0
        %v1065 = vmul.f32 %v1017, 2.0
        %v1066 = vmul.f32 %v1020, 2.0
        %v1067 = vmul.f32 %v1023, 2.0
        %v1068 = vmul.f32 %v1026, 2.0
        %v1069 = vmul.f32 %v1029, 2.0
        %v1070 = vmul.f32 %v1032, 2.0
        %v1071 = vmul.f32 %v1035, 2.0
        %v1072 = vmul.f32 %v1038, 2.0
        %v1073 = vmul.f32 %v1041, 2.0
        %v1074 = vsub.f32 %v1042, %v1058
        %v1075 = vsub.f32 %v1043, %v1059
        %v1076 = vsub.f32 %v1044, %v1060
        %v1077 = vsub.f32 %v1045, %v1061
        %v1078 = vsub.f32 %v1046, %v1062
        %v1079 = vsub.f32 %v1047, %v1063
        %v1080 = vsub.f32 %v1048, %v1064
        %v1081 = vsub.f32 %v1049, %v1065
        %v1082 = vsub.f32 %v1050, %v1066
        %v1083 = vsub.f32 %v1051, %v1067
        %v1084 = vsub.f32 %v1052, %v1068
        %v1085 = vsub.f32 %v1053, %v1069
        %v1086 = vsub.f32 %v1054, %v1070
        %v1087 = vsub.f32 %v1055, %v1071
        %v1088 = vsub.f32 %v1056, %v1072
        %v1089 = vsub.f32 %v1057, %v1073
        %v1090 = vmax.f32 %v1074, 0.0
        %v1091 = vmax.f32 %v1075, 0.0
        %v1092 = vmax.f32 %v1076, 0.0
        %v1093 = vmax.f32 %v1077, 0.0
        %v1094 = vmax.f32 %v1078, 0.0
        %v1095 = vmax.f32 %v1079, 0.0
        %v1096 = vmax.f32 %v1080, 0.0
        %v1097 = vmax.f32 %v1081, 0.0
        %v1098 = vmax.f32 %v1082, 0.0
        %v1099 = vmax.f32 %v1083, 0.0
        %v1100 = vmax.f32 %v1084, 0.0
        %v1101 = vmax.f32 %v1085, 0.0
        %v1102 = vmax.f32 %v1086, 0.0
        %v1103 = vmax.f32 %v1087, 0.0
        %v1104 = vmax.f32 %v1088, 0.0
        %v1105 = vmax.f32 %v1089, 0.0
        %v1106 = vrsqrt.pop %v868
        %v1107 = vmul.f32 %v868, %v1106
        %vm1108 = vcmp.eq.f32.partialorder %v868, inf
        %v1109 = vsel %vm1108, %v868, %v1107
        %vm1110 = vcmp.eq.f32.partialorder %v868, 0.0
        %v1111 = vand.u32 %v868, 2147483648
        %v1112 = vsel %vm1110, %v1111, %v1109
        %v1113 = vrsqrt.pop %v871
        %v1114 = vmul.f32 %v871, %v1113
        %vm1115 = vcmp.eq.f32.partialorder %v871, inf
        %v1116 = vsel %vm1115, %v871, %v1114
        %vm1117 = vcmp.eq.f32.partialorder %v871, 0.0
        %v1118 = vand.u32 %v871, 2147483648
        %v1119 = vsel %vm1117, %v1118, %v1116
        %v1120 = vrsqrt.pop %v874
        %v1121 = vmul.f32 %v874, %v1120
        %vm1122 = vcmp.eq.f32.partialorder %v874, inf
        %v1123 = vsel %vm1122, %v874, %v1121
        %vm1124 = vcmp.eq.f32.partialorder %v874, 0.0
        %v1125 = vand.u32 %v874, 2147483648
        %v1126 = vsel %vm1124, %v1125, %v1123
        %v1127 = vrsqrt.pop %v877
        %v1128 = vmul.f32 %v877, %v1127
        %vm1129 = vcmp.eq.f32.partialorder %v877, inf
        %v1130 = vsel %vm1129, %v877, %v1128
        %vm1131 = vcmp.eq.f32.partialorder %v877, 0.0
        %v1132 = vand.u32 %v877, 2147483648
        %v1133 = vsel %vm1131, %v1132, %v1130
        %v1134 = vrsqrt.pop %v880
        %v1135 = vmul.f32 %v880, %v1134
        %vm1136 = vcmp.eq.f32.partialorder %v880, inf
        %v1137 = vsel %vm1136, %v880, %v1135
        %vm1138 = vcmp.eq.f32.partialorder %v880, 0.0
        %v1139 = vand.u32 %v880, 2147483648
        %v1140 = vsel %vm1138, %v1139, %v1137
        %v1141 = vrsqrt.pop %v883
        %v1142 = vmul.f32 %v883, %v1141
        %vm1143 = vcmp.eq.f32.partialorder %v883, inf
        %v1144 = vsel %vm1143, %v883, %v1142
        %vm1145 = vcmp.eq.f32.partialorder %v883, 0.0
        %v1146 = vand.u32 %v883, 2147483648
        %v1147 = vsel %vm1145, %v1146, %v1144
        %v1148 = vrsqrt.pop %v886
        %v1149 = vmul.f32 %v886, %v1148
        %vm1150 = vcmp.eq.f32.partialorder %v886, inf
        %v1151 = vsel %vm1150, %v886, %v1149
        %vm1152 = vcmp.eq.f32.partialorder %v886, 0.0
        %v1153 = vand.u32 %v886, 2147483648
        %v1154 = vsel %vm1152, %v1153, %v1151
        %v1155 = vrsqrt.pop %v889
        %v1156 = vmul.f32 %v889, %v1155
        %vm1157 = vcmp.eq.f32.partialorder %v889, inf
        %v1158 = vsel %vm1157, %v889, %v1156
        %vm1159 = vcmp.eq.f32.partialorder %v889, 0.0
        %v1160 = vand.u32 %v889, 2147483648
        %v1161 = vsel %vm1159, %v1160, %v1158
        %v1162 = vrsqrt.pop %v892
        %v1163 = vmul.f32 %v892, %v1162
        %vm1164 = vcmp.eq.f32.partialorder %v892, inf
        %v1165 = vsel %vm1164, %v892, %v1163
        %vm1166 = vcmp.eq.f32.partialorder %v892, 0.0
        %v1167 = vand.u32 %v892, 2147483648
        %v1168 = vsel %vm1166, %v1167, %v1165
        %v1169 = vrsqrt.pop %v895
        %v1170 = vmul.f32 %v895, %v1169
        %vm1171 = vcmp.eq.f32.partialorder %v895, inf
        %v1172 = vsel %vm1171, %v895, %v1170
        %vm1173 = vcmp.eq.f32.partialorder %v895, 0.0
        %v1174 = vand.u32 %v895, 2147483648
        %v1175 = vsel %vm1173, %v1174, %v1172
        %v1176 = vrsqrt.pop %v898
        %v1177 = vmul.f32 %v898, %v1176
        %vm1178 = vcmp.eq.f32.partialorder %v898, inf
        %v1179 = vsel %vm1178, %v898, %v1177
        %vm1180 = vcmp.eq.f32.partialorder %v898, 0.0
        %v1181 = vand.u32 %v898, 2147483648
        %v1182 = vsel %vm1180, %v1181, %v1179
        %v1183 = vrsqrt.pop %v901
        %v1184 = vmul.f32 %v901, %v1183
        %vm1185 = vcmp.eq.f32.partialorder %v901, inf
        %v1186 = vsel %vm1185, %v901, %v1184
        %vm1187 = vcmp.eq.f32.partialorder %v901, 0.0
        %v1188 = vand.u32 %v901, 2147483648
        %v1189 = vsel %vm1187, %v1188, %v1186
        %v1190 = vrsqrt.pop %v904
        %v1191 = vmul.f32 %v904, %v1190
        %vm1192 = vcmp.eq.f32.partialorder %v904, inf
        %v1193 = vsel %vm1192, %v904, %v1191
        %vm1194 = vcmp.eq.f32.partialorder %v904, 0.0
        %v1195 = vand.u32 %v904, 2147483648
        %v1196 = vsel %vm1194, %v1195, %v1193
        %v1197 = vrsqrt.pop %v907
        %v1198 = vmul.f32 %v907, %v1197
        %vm1199 = vcmp.eq.f32.partialorder %v907, inf
        %v1200 = vsel %vm1199, %v907, %v1198
        %vm1201 = vcmp.eq.f32.partialorder %v907, 0.0
        %v1202 = vand.u32 %v907, 2147483648
        %v1203 = vsel %vm1201, %v1202, %v1200
        %v1204 = vrsqrt.pop %v910
        %v1205 = vmul.f32 %v910, %v1204
        %vm1206 = vcmp.eq.f32.partialorder %v910, inf
        %v1207 = vsel %vm1206, %v910, %v1205
        %vm1208 = vcmp.eq.f32.partialorder %v910, 0.0
        %v1209 = vand.u32 %v910, 2147483648
        %v1210 = vsel %vm1208, %v1209, %v1207
        %v1211 = vrsqrt.pop %v913
        %v1212 = vmul.f32 %v913, %v1211
        %vm1213 = vcmp.eq.f32.partialorder %v913, inf
        %v1214 = vsel %vm1213, %v913, %v1212
        %vm1215 = vcmp.eq.f32.partialorder %v913, 0.0
        %v1216 = vand.u32 %v913, 2147483648
        %v1217 = vsel %vm1215, %v1216, %v1214
        %v1218 = vrsqrt.pop %v932
        %v1219 = vmul.f32 %v932, %v1218
        %vm1220 = vcmp.eq.f32.partialorder %v932, inf
        %v1221 = vsel %vm1220, %v932, %v1219
        %vm1222 = vcmp.eq.f32.partialorder %v932, 0.0
        %v1223 = vand.u32 %v932, 2147483648
        %v1224 = vsel %vm1222, %v1223, %v1221
        %v1225 = vrsqrt.pop %v935
        %v1226 = vmul.f32 %v935, %v1225
        %vm1227 = vcmp.eq.f32.partialorder %v935, inf
        %v1228 = vsel %vm1227, %v935, %v1226
        %vm1229 = vcmp.eq.f32.partialorder %v935, 0.0
        %v1230 = vand.u32 %v935, 2147483648
        %v1231 = vsel %vm1229, %v1230, %v1228
        %v1232 = vrsqrt.pop %v938
        %v1233 = vmul.f32 %v938, %v1232
        %vm1234 = vcmp.eq.f32.partialorder %v938, inf
        %v1235 = vsel %vm1234, %v938, %v1233
        %vm1236 = vcmp.eq.f32.partialorder %v938, 0.0
        %v1237 = vand.u32 %v938, 2147483648
        %v1238 = vsel %vm1236, %v1237, %v1235
        %v1239 = vrsqrt.pop %v941
        %v1240 = vmul.f32 %v941, %v1239
        %vm1241 = vcmp.eq.f32.partialorder %v941, inf
        %v1242 = vsel %vm1241, %v941, %v1240
        %vm1243 = vcmp.eq.f32.partialorder %v941, 0.0
        %v1244 = vand.u32 %v941, 2147483648
        %v1245 = vsel %vm1243, %v1244, %v1242
        %v1246 = vrsqrt.pop %v944
        %v1247 = vmul.f32 %v944, %v1246
        %vm1248 = vcmp.eq.f32.partialorder %v944, inf
        %v1249 = vsel %vm1248, %v944, %v1247
        %vm1250 = vcmp.eq.f32.partialorder %v944, 0.0
        %v1251 = vand.u32 %v944, 2147483648
        %v1252 = vsel %vm1250, %v1251, %v1249
        %v1253 = vrsqrt.pop %v947
        %v1254 = vmul.f32 %v947, %v1253
        %vm1255 = vcmp.eq.f32.partialorder %v947, inf
        %v1256 = vsel %vm1255, %v947, %v1254
        %vm1257 = vcmp.eq.f32.partialorder %v947, 0.0
        %v1258 = vand.u32 %v947, 2147483648
        %v1259 = vsel %vm1257, %v1258, %v1256
        %v1260 = vrsqrt.pop %v950
        %v1261 = vmul.f32 %v950, %v1260
        %vm1262 = vcmp.eq.f32.partialorder %v950, inf
        %v1263 = vsel %vm1262, %v950, %v1261
        %vm1264 = vcmp.eq.f32.partialorder %v950, 0.0
        %v1265 = vand.u32 %v950, 2147483648
        %v1266 = vsel %vm1264, %v1265, %v1263
        %v1267 = vrsqrt.pop %v953
        %v1268 = vmul.f32 %v953, %v1267
        %vm1269 = vcmp.eq.f32.partialorder %v953, inf
        %v1270 = vsel %vm1269, %v953, %v1268
        %vm1271 = vcmp.eq.f32.partialorder %v953, 0.0
        %v1272 = vand.u32 %v953, 2147483648
        %v1273 = vsel %vm1271, %v1272, %v1270
        %v1274 = vrsqrt.pop %v956
        %v1275 = vmul.f32 %v956, %v1274
        %vm1276 = vcmp.eq.f32.partialorder %v956, inf
        %v1277 = vsel %vm1276, %v956, %v1275
        %vm1278 = vcmp.eq.f32.partialorder %v956, 0.0
        %v1279 = vand.u32 %v956, 2147483648
        %v1280 = vsel %vm1278, %v1279, %v1277
        %v1281 = vrsqrt.pop %v959
        %v1282 = vmul.f32 %v959, %v1281
        %vm1283 = vcmp.eq.f32.partialorder %v959, inf
        %v1284 = vsel %vm1283, %v959, %v1282
        %vm1285 = vcmp.eq.f32.partialorder %v959, 0.0
        %v1286 = vand.u32 %v959, 2147483648
        %v1287 = vsel %vm1285, %v1286, %v1284
        %v1288 = vrsqrt.pop %v962
        %v1289 = vmul.f32 %v962, %v1288
        %vm1290 = vcmp.eq.f32.partialorder %v962, inf
        %v1291 = vsel %vm1290, %v962, %v1289
        %vm1292 = vcmp.eq.f32.partialorder %v962, 0.0
        %v1293 = vand.u32 %v962, 2147483648
        %v1294 = vsel %vm1292, %v1293, %v1291
        %v1295 = vrsqrt.pop %v965
        %v1296 = vmul.f32 %v965, %v1295
        %vm1297 = vcmp.eq.f32.partialorder %v965, inf
        %v1298 = vsel %vm1297, %v965, %v1296
        %vm1299 = vcmp.eq.f32.partialorder %v965, 0.0
        %v1300 = vand.u32 %v965, 2147483648
        %v1301 = vsel %vm1299, %v1300, %v1298
        %v1302 = vrsqrt.pop %v968
        %v1303 = vmul.f32 %v968, %v1302
        %vm1304 = vcmp.eq.f32.partialorder %v968, inf
        %v1305 = vsel %vm1304, %v968, %v1303
        %vm1306 = vcmp.eq.f32.partialorder %v968, 0.0
        %v1307 = vand.u32 %v968, 2147483648
        %v1308 = vsel %vm1306, %v1307, %v1305
        %v1309 = vrsqrt.pop %v971
        %v1310 = vmul.f32 %v971, %v1309
        %vm1311 = vcmp.eq.f32.partialorder %v971, inf
        %v1312 = vsel %vm1311, %v971, %v1310
        %vm1313 = vcmp.eq.f32.partialorder %v971, 0.0
        %v1314 = vand.u32 %v971, 2147483648
        %v1315 = vsel %vm1313, %v1314, %v1312
        %v1316 = vrsqrt.pop %v974
        %v1317 = vmul.f32 %v974, %v1316
        %vm1318 = vcmp.eq.f32.partialorder %v974, inf
        %v1319 = vsel %vm1318, %v974, %v1317
        %vm1320 = vcmp.eq.f32.partialorder %v974, 0.0
        %v1321 = vand.u32 %v974, 2147483648
        %v1322 = vsel %vm1320, %v1321, %v1319
        %v1323 = vrsqrt.pop %v977
        %v1324 = vmul.f32 %v977, %v1323
        %vm1325 = vcmp.eq.f32.partialorder %v977, inf
        %v1326 = vsel %vm1325, %v977, %v1324
        %vm1327 = vcmp.eq.f32.partialorder %v977, 0.0
        %v1328 = vand.u32 %v977, 2147483648
        %v1329 = vsel %vm1327, %v1328, %v1326
        %v1330 = vmul.f32 %v1112, %v1224
        %v1331 = vmul.f32 %v1119, %v1231
        %v1332 = vmul.f32 %v1126, %v1238
        %v1333 = vmul.f32 %v1133, %v1245
        %v1334 = vmul.f32 %v1140, %v1252
        %v1335 = vmul.f32 %v1147, %v1259
        %v1336 = vmul.f32 %v1154, %v1266
        %v1337 = vmul.f32 %v1161, %v1273
        %v1338 = vmul.f32 %v1168, %v1280
        %v1339 = vmul.f32 %v1175, %v1287
        %v1340 = vmul.f32 %v1182, %v1294
        %v1341 = vmul.f32 %v1189, %v1301
        %v1342 = vmul.f32 %v1196, %v1308
        %v1343 = vmul.f32 %v1203, %v1315
        %v1344 = vmul.f32 %v1210, %v1322
        %v1345 = vmul.f32 %v1217, %v1329
        %v1346 = vmax.f32 %v1330, 1e-08
        %v1347 = vmax.f32 %v1331, 1e-08
        %v1348 = vmax.f32 %v1332, 1e-08
        %v1349 = vmax.f32 %v1333, 1e-08
        %v1350 = vmax.f32 %v1334, 1e-08
        %v1351 = vmax.f32 %v1335, 1e-08
        %v1352 = vmax.f32 %v1336, 1e-08
        %v1353 = vmax.f32 %v1337, 1e-08
        %v1354 = vmax.f32 %v1338, 1e-08
        %v1355 = vmax.f32 %v1339, 1e-08
        %v1356 = vmax.f32 %v1340, 1e-08
        %v1357 = vmax.f32 %v1341, 1e-08
        %v1358 = vmax.f32 %v1342, 1e-08
        %v1359 = vmax.f32 %v1343, 1e-08
        %v1360 = vmax.f32 %v1344, 1e-08
        %v1361 = vmax.f32 %v1345, 1e-08
        %v1362 = vrcp.pop %v1346
        %v1363 = vrcp.pop %v1347
        %v1364 = vrcp.pop %v1348
        %v1365 = vrcp.pop %v1349
        %v1366 = vrcp.pop %v1350
        %v1367 = vrcp.pop %v1351
        %v1368 = vrcp.pop %v1352
        %v1369 = vrcp.pop %v1353
        %v1370 = vrcp.pop %v1354
        %v1371 = vrcp.pop %v1355
        %v1372 = vrcp.pop %v1356
        %v1373 = vrcp.pop %v1357
        %v1374 = vrcp.pop %v1358
        %v1375 = vrcp.pop %v1359
        %v1376 = vrcp.pop %v1360
        %v1377 = vrcp.pop %v1361
        %v1378 = vmul.f32 %v996, %v1362
        %v1379 = vmul.f32 %v999, %v1363
        %v1380 = vmul.f32 %v1002, %v1364
        %v1381 = vmul.f32 %v1005, %v1365
        %v1382 = vmul.f32 %v1008, %v1366
        %v1383 = vmul.f32 %v1011, %v1367
        %v1384 = vmul.f32 %v1014, %v1368
        %v1385 = vmul.f32 %v1017, %v1369
        %v1386 = vmul.f32 %v1020, %v1370
        %v1387 = vmul.f32 %v1023, %v1371
        %v1388 = vmul.f32 %v1026, %v1372
        %v1389 = vmul.f32 %v1029, %v1373
        %v1390 = vmul.f32 %v1032, %v1374
        %v1391 = vmul.f32 %v1035, %v1375
        %v1392 = vmul.f32 %v1038, %v1376
        %v1393 = vmul.f32 %v1041, %v1377
        %v1394 = vrsqrt.pop %v1090
        %v1395 = vmul.f32 %v1090, %v1394
        %vm1396 = vcmp.eq.f32.partialorder %v1090, inf
        %v1397 = vsel %vm1396, %v1090, %v1395
        %vm1398 = vcmp.eq.f32.partialorder %v1090, 0.0
        %v1399 = vand.u32 %v1090, 2147483648
        %v1400 = vsel %vm1398, %v1399, %v1397
        %v1401 = vrsqrt.pop %v1091
        %v1402 = vmul.f32 %v1091, %v1401
        %vm1403 = vcmp.eq.f32.partialorder %v1091, inf
        %v1404 = vsel %vm1403, %v1091, %v1402
        %vm1405 = vcmp.eq.f32.partialorder %v1091, 0.0
        %v1406 = vand.u32 %v1091, 2147483648
        %v1407 = vsel %vm1405, %v1406, %v1404
        %v1408 = vrsqrt.pop %v1092
        %v1409 = vmul.f32 %v1092, %v1408
        %vm1410 = vcmp.eq.f32.partialorder %v1092, inf
        %v1411 = vsel %vm1410, %v1092, %v1409
        %vm1412 = vcmp.eq.f32.partialorder %v1092, 0.0
        %v1413 = vand.u32 %v1092, 2147483648
        %v1414 = vsel %vm1412, %v1413, %v1411
        %v1415 = vrsqrt.pop %v1093
        %v1416 = vmul.f32 %v1093, %v1415
        %vm1417 = vcmp.eq.f32.partialorder %v1093, inf
        %v1418 = vsel %vm1417, %v1093, %v1416
        %vm1419 = vcmp.eq.f32.partialorder %v1093, 0.0
        %v1420 = vand.u32 %v1093, 2147483648
        %v1421 = vsel %vm1419, %v1420, %v1418
        %v1422 = vrsqrt.pop %v1094
        %v1423 = vmul.f32 %v1094, %v1422
        %vm1424 = vcmp.eq.f32.partialorder %v1094, inf
        %v1425 = vsel %vm1424, %v1094, %v1423
        %vm1426 = vcmp.eq.f32.partialorder %v1094, 0.0
        %v1427 = vand.u32 %v1094, 2147483648
        %v1428 = vsel %vm1426, %v1427, %v1425
        %v1429 = vrsqrt.pop %v1095
        %v1430 = vmul.f32 %v1095, %v1429
        %vm1431 = vcmp.eq.f32.partialorder %v1095, inf
        %v1432 = vsel %vm1431, %v1095, %v1430
        %vm1433 = vcmp.eq.f32.partialorder %v1095, 0.0
        %v1434 = vand.u32 %v1095, 2147483648
        %v1435 = vsel %vm1433, %v1434, %v1432
        %v1436 = vrsqrt.pop %v1096
        %v1437 = vmul.f32 %v1096, %v1436
        %vm1438 = vcmp.eq.f32.partialorder %v1096, inf
        %v1439 = vsel %vm1438, %v1096, %v1437
        %vm1440 = vcmp.eq.f32.partialorder %v1096, 0.0
        %v1441 = vand.u32 %v1096, 2147483648
        %v1442 = vsel %vm1440, %v1441, %v1439
        %v1443 = vrsqrt.pop %v1097
        %v1444 = vmul.f32 %v1097, %v1443
        %vm1445 = vcmp.eq.f32.partialorder %v1097, inf
        %v1446 = vsel %vm1445, %v1097, %v1444
        %vm1447 = vcmp.eq.f32.partialorder %v1097, 0.0
        %v1448 = vand.u32 %v1097, 2147483648
        %v1449 = vsel %vm1447, %v1448, %v1446
        %v1450 = vrsqrt.pop %v1098
        %v1451 = vmul.f32 %v1098, %v1450
        %vm1452 = vcmp.eq.f32.partialorder %v1098, inf
        %v1453 = vsel %vm1452, %v1098, %v1451
        %vm1454 = vcmp.eq.f32.partialorder %v1098, 0.0
        %v1455 = vand.u32 %v1098, 2147483648
        %v1456 = vsel %vm1454, %v1455, %v1453
        %v1457 = vrsqrt.pop %v1099
        %v1458 = vmul.f32 %v1099, %v1457
        %vm1459 = vcmp.eq.f32.partialorder %v1099, inf
        %v1460 = vsel %vm1459, %v1099, %v1458
        %vm1461 = vcmp.eq.f32.partialorder %v1099, 0.0
        %v1462 = vand.u32 %v1099, 2147483648
        %v1463 = vsel %vm1461, %v1462, %v1460
        %v1464 = vrsqrt.pop %v1100
        %v1465 = vmul.f32 %v1100, %v1464
        %vm1466 = vcmp.eq.f32.partialorder %v1100, inf
        %v1467 = vsel %vm1466, %v1100, %v1465
        %vm1468 = vcmp.eq.f32.partialorder %v1100, 0.0
        %v1469 = vand.u32 %v1100, 2147483648
        %v1470 = vsel %vm1468, %v1469, %v1467
        %v1471 = vrsqrt.pop %v1101
        %v1472 = vmul.f32 %v1101, %v1471
        %vm1473 = vcmp.eq.f32.partialorder %v1101, inf
        %v1474 = vsel %vm1473, %v1101, %v1472
        %vm1475 = vcmp.eq.f32.partialorder %v1101, 0.0
        %v1476 = vand.u32 %v1101, 2147483648
        %v1477 = vsel %vm1475, %v1476, %v1474
        %v1478 = vrsqrt.pop %v1102
        %v1479 = vmul.f32 %v1102, %v1478
        %vm1480 = vcmp.eq.f32.partialorder %v1102, inf
        %v1481 = vsel %vm1480, %v1102, %v1479
        %vm1482 = vcmp.eq.f32.partialorder %v1102, 0.0
        %v1483 = vand.u32 %v1102, 2147483648
        %v1484 = vsel %vm1482, %v1483, %v1481
        %v1485 = vrsqrt.pop %v1103
        %v1486 = vmul.f32 %v1103, %v1485
        %vm1487 = vcmp.eq.f32.partialorder %v1103, inf
        %v1488 = vsel %vm1487, %v1103, %v1486
        %vm1489 = vcmp.eq.f32.partialorder %v1103, 0.0
        %v1490 = vand.u32 %v1103, 2147483648
        %v1491 = vsel %vm1489, %v1490, %v1488
        %v1492 = vrsqrt.pop %v1104
        %v1493 = vmul.f32 %v1104, %v1492
        %vm1494 = vcmp.eq.f32.partialorder %v1104, inf
        %v1495 = vsel %vm1494, %v1104, %v1493
        %vm1496 = vcmp.eq.f32.partialorder %v1104, 0.0
        %v1497 = vand.u32 %v1104, 2147483648
        %v1498 = vsel %vm1496, %v1497, %v1495
        %v1499 = vrsqrt.pop %v1105
        %v1500 = vmul.f32 %v1105, %v1499
        %vm1501 = vcmp.eq.f32.partialorder %v1105, inf
        %v1502 = vsel %vm1501, %v1105, %v1500
        %vm1503 = vcmp.eq.f32.partialorder %v1105, 0.0
        %v1504 = vand.u32 %v1105, 2147483648
        %v1505 = vsel %vm1503, %v1504, %v1502
        %v1506 = vmax.f32 %v1112, 1e-10
        %v1507 = vmax.f32 %v1119, 1e-10
        %v1508 = vmax.f32 %v1126, 1e-10
        %v1509 = vmax.f32 %v1133, 1e-10
        %v1510 = vmax.f32 %v1140, 1e-10
        %v1511 = vmax.f32 %v1147, 1e-10
        %v1512 = vmax.f32 %v1154, 1e-10
        %v1513 = vmax.f32 %v1161, 1e-10
        %v1514 = vmax.f32 %v1168, 1e-10
        %v1515 = vmax.f32 %v1175, 1e-10
        %v1516 = vmax.f32 %v1182, 1e-10
        %v1517 = vmax.f32 %v1189, 1e-10
        %v1518 = vmax.f32 %v1196, 1e-10
        %v1519 = vmax.f32 %v1203, 1e-10
        %v1520 = vmax.f32 %v1210, 1e-10
        %v1521 = vmax.f32 %v1217, 1e-10
        %v1522 = vrcp.pop %v1506
        %v1523 = vrcp.pop %v1507
        %v1524 = vrcp.pop %v1508
        %v1525 = vrcp.pop %v1509
        %v1526 = vrcp.pop %v1510
        %v1527 = vrcp.pop %v1511
        %v1528 = vrcp.pop %v1512
        %v1529 = vrcp.pop %v1513
        %v1530 = vrcp.pop %v1514
        %v1531 = vrcp.pop %v1515
        %v1532 = vrcp.pop %v1516
        %v1533 = vrcp.pop %v1517
        %v1534 = vrcp.pop %v1518
        %v1535 = vrcp.pop %v1519
        %v1536 = vrcp.pop %v1520
        %v1537 = vrcp.pop %v1521
        %v1538 = vmul.f32 %v1400, %v1522
        %v1539 = vmul.f32 %v1407, %v1523
        %v1540 = vmul.f32 %v1414, %v1524
        %v1541 = vmul.f32 %v1421, %v1525
        %v1542 = vmul.f32 %v1428, %v1526
        %v1543 = vmul.f32 %v1435, %v1527
        %v1544 = vmul.f32 %v1442, %v1528
        %v1545 = vmul.f32 %v1449, %v1529
        %v1546 = vmul.f32 %v1456, %v1530
        %v1547 = vmul.f32 %v1463, %v1531
        %v1548 = vmul.f32 %v1470, %v1532
        %v1549 = vmul.f32 %v1477, %v1533
        %v1550 = vmul.f32 %v1484, %v1534
        %v1551 = vmul.f32 %v1491, %v1535
        %v1552 = vmul.f32 %v1498, %v1536
        %v1553 = vmul.f32 %v1505, %v1537
        %v1554 = vld [vmem:[%s5] sm:$0x3f]
        %v1555 = vlaneseq
        %v1556 = vshrl.u32 %v1555, 7
        %v1557 = vsub.s32 4, %v1556
        %v1558 = vrot.slane %v1554, %v1557
        %v1559 = vmul.f32 %v1538, %v1558
        %v1560 = vmul.f32 %v1539, %v1558
        %v1561 = vmul.f32 %v1540, %v1558
        %v1562 = vmul.f32 %v1541, %v1558
        %v1563 = vmul.f32 %v1542, %v1558
        %v1564 = vmul.f32 %v1543, %v1558
        %v1565 = vmul.f32 %v1544, %v1558
        %v1566 = vmul.f32 %v1545, %v1558
        %v1567 = vmul.f32 %v1546, %v1558
        %v1568 = vmul.f32 %v1547, %v1558
        %v1569 = vmul.f32 %v1548, %v1558
        %v1570 = vmul.f32 %v1549, %v1558
        %v1571 = vmul.f32 %v1550, %v1558
        %v1572 = vmul.f32 %v1551, %v1558
        %v1573 = vmul.f32 %v1552, %v1558
        %v1574 = vmul.f32 %v1553, %v1558
        %v1576 = vsel %vm669, %v1554, 0
        %1578 = vmatprep.subr.mxu0 0.0
        %1579 = vmatpush1.msra.mxu0 %v1576
        %1580 = vmatprep.subr.mxu0 0.0
        %1581 = vmatpush1.msra.mxu0 0.0
        %1582 = vmatprep.subr.mxu0 0.0
        %1583 = vmatpush1.msra.mxu0 0.0
        %1584 = vmatprep.subr.mxu0 0.0
        %1585 = vmatpush1.msra.mxu0 0.0
        %1586 = vmatprep.subr.mxu0 0.0
        %1587 = vmatpush1.msra.mxu0 0.0
        %1588 = vmatprep.subr.mxu0 0.0
        %1589 = vmatpush1.msra.mxu0 0.0
        %1590 = vmatprep.subr.mxu0 0.0
        %1591 = vmatpush1.msra.mxu0 0.0
        %1592 = vmatprep.subr.mxu0 0.0
        %1593 = vmatpush1.msra.mxu0 0.0
        %1594 = vmatprep.subr.mxu0 0.0
        %1595 = vmatpush1.msra.mxu0 0.0
        %1596 = vmatprep.subr.mxu0 0.0
        %1597 = vmatpush1.msra.mxu0 0.0
        %1598 = vmatprep.subr.mxu0 0.0
        %1599 = vmatpush1.msra.mxu0 0.0
        %1600 = vmatprep.subr.mxu0 0.0
        %1601 = vmatpush1.msra.mxu0 0.0
        %1602 = vmatprep.subr.mxu0 0.0
        %1603 = vmatpush1.msra.mxu0 0.0
        %1604 = vmatprep.subr.mxu0 0.0
        %1605 = vmatpush1.msra.mxu0 0.0
        %1606 = vmatprep.subr.mxu0 0.0
        %1607 = vmatpush1.msra.mxu0 0.0
        %1608 = vmatprep.subr.mxu0 0.0
        %1609 = vmatpush1.msra.mxu0 0.0
        %1610 = vmatprep.subr.mxu0 0.0
        %1611 = vmatpush1.msra.mxu0 0.0
        %1612 = vmatprep.subr.mxu0 0.0
        %1613 = vmatpush1.msra.mxu0 0.0
        %1614 = vmatprep.subr.mxu0 0.0
        %1615 = vmatpush1.msra.mxu0 0.0
        %1616 = vmatprep.subr.mxu0 0.0
        %1617 = vmatpush1.msra.mxu0 0.0
        %1618 = vmatprep.subr.mxu0 0.0
        %1619 = vmatpush1.msra.mxu0 0.0
        %1620 = vmatprep.subr.mxu0 0.0
        %1621 = vmatpush1.msra.mxu0 0.0
        %1622 = vmatprep.subr.mxu0 0.0
        %1623 = vmatpush1.msra.mxu0 0.0
        %1624 = vmatprep.subr.mxu0 0.0
        %1625 = vmatpush1.msra.mxu0 0.0
        %1626 = vmatprep.subr.mxu0 0.0
        %1627 = vmatpush1.msra.mxu0 0.0
        %1628 = vmatprep.subr.mxu0 0.0
        %1629 = vmatpush1.msra.mxu0 0.0
        %1630 = vmatprep.subr.mxu0 0.0
        %1631 = vmatpush1.msra.mxu0 0.0
        %1632 = vmatprep.subr.mxu0 0.0
        %1633 = vmatpush1.msra.mxu0 0.0
        %1634 = vmatprep.subr.mxu0 0.0
        %1635 = vmatpush1.msra.mxu0 0.0
        %1636 = vmatprep.subr.mxu0 0.0
        %1637 = vmatpush1.msra.mxu0 0.0
        %1638 = vmatprep.subr.mxu0 0.0
        %1639 = vmatpush1.msra.mxu0 0.0
        %1640 = vmatprep.subr.mxu0 0.0
        %1641 = vmatpush1.msra.mxu0 0.0
        %1642 = vmatprep.mubr.f32.mxu0 0.0
        %1643 = vmatmul.mubr.f32.gmra.mrb[0].mxu0 %v622
        %v1644 = vpop.f32.mrb[0].mxu0
        %v1645 = vadd.f32 %v1559, %v1644
        %v1646 = vpop.f32.mrb[0].mxu0
        %1647 = vmatprep.mubr.f32.mxu0 0.0
        %1648 = vmatmul.mubr.f32.gmra.mrb[0].mxu0 %v625
        %v1649 = vpop.f32.mrb[0].mxu0
        %v1650 = vadd.f32 %v1560, %v1649
        %v1651 = vpop.f32.mrb[0].mxu0
        %1652 = vmatprep.mubr.f32.mxu0 0.0
        %1653 = vmatmul.mubr.f32.gmra.mrb[0].mxu0 %v628
        %v1654 = vpop.f32.mrb[0].mxu0
        %v1655 = vadd.f32 %v1561, %v1654
        %v1656 = vpop.f32.mrb[0].mxu0
        %1657 = vmatprep.mubr.f32.mxu0 0.0
        %1658 = vmatmul.mubr.f32.gmra.mrb[0].mxu0 %v631
        %v1659 = vpop.f32.mrb[0].mxu0
        %v1660 = vadd.f32 %v1562, %v1659
        %v1661 = vpop.f32.mrb[0].mxu0
        %1662 = vmatprep.mubr.f32.mxu0 0.0
        %1663 = vmatmul.mubr.f32.gmra.mrb[0].mxu0 %v634
        %v1664 = vpop.f32.mrb[0].mxu0
        %v1665 = vadd.f32 %v1563, %v1664
        %v1666 = vpop.f32.mrb[0].mxu0
        %1667 = vmatprep.mubr.f32.mxu0 0.0
        %1668 = vmatmul.mubr.f32.gmra.mrb[0].mxu0 %v637
        %v1669 = vpop.f32.mrb[0].mxu0
        %v1670 = vadd.f32 %v1564, %v1669
        %v1671 = vpop.f32.mrb[0].mxu0
        %1672 = vmatprep.mubr.f32.mxu0 0.0
        %1673 = vmatmul.mubr.f32.gmra.mrb[0].mxu0 %v640
        %v1674 = vpop.f32.mrb[0].mxu0
        %v1675 = vadd.f32 %v1565, %v1674
        %v1676 = vpop.f32.mrb[0].mxu0
        %1677 = vmatprep.mubr.f32.mxu0 0.0
        %1678 = vmatmul.mubr.f32.gmra.mrb[0].mxu0 %v643
        %v1679 = vpop.f32.mrb[0].mxu0
        %v1680 = vadd.f32 %v1566, %v1679
        %v1681 = vpop.f32.mrb[0].mxu0
        %1682 = vmatprep.mubr.f32.mxu0 0.0
        %1683 = vmatmul.mubr.f32.gmra.mrb[0].mxu0 %v646
        %v1684 = vpop.f32.mrb[0].mxu0
        %v1685 = vadd.f32 %v1567, %v1684
        %v1686 = vpop.f32.mrb[0].mxu0
        %1687 = vmatprep.mubr.f32.mxu0 0.0
        %1688 = vmatmul.mubr.f32.gmra.mrb[0].mxu0 %v649
        %v1689 = vpop.f32.mrb[0].mxu0
        %v1690 = vadd.f32 %v1568, %v1689
        %v1691 = vpop.f32.mrb[0].mxu0
        %1692 = vmatprep.mubr.f32.mxu0 0.0
        %1693 = vmatmul.mubr.f32.gmra.mrb[0].mxu0 %v652
        %v1694 = vpop.f32.mrb[0].mxu0
        %v1695 = vadd.f32 %v1569, %v1694
        %v1696 = vpop.f32.mrb[0].mxu0
        %1697 = vmatprep.mubr.f32.mxu0 0.0
        %1698 = vmatmul.mubr.f32.gmra.mrb[0].mxu0 %v655
        %v1699 = vpop.f32.mrb[0].mxu0
        %v1700 = vadd.f32 %v1570, %v1699
        %v1701 = vpop.f32.mrb[0].mxu0
        %1702 = vmatprep.mubr.f32.mxu0 0.0
        %1703 = vmatmul.mubr.f32.gmra.mrb[0].mxu0 %v658
        %v1704 = vpop.f32.mrb[0].mxu0
        %v1705 = vadd.f32 %v1571, %v1704
        %v1706 = vpop.f32.mrb[0].mxu0
        %1707 = vmatprep.mubr.f32.mxu0 0.0
        %1708 = vmatmul.mubr.f32.gmra.mrb[0].mxu0 %v661
        %v1709 = vpop.f32.mrb[0].mxu0
        %v1710 = vadd.f32 %v1572, %v1709
        %v1711 = vpop.f32.mrb[0].mxu0
        %1712 = vmatprep.mubr.f32.mxu0 0.0
        %1713 = vmatmul.mubr.f32.gmra.mrb[0].mxu0 %v664
        %v1714 = vpop.f32.mrb[0].mxu0
        %v1715 = vadd.f32 %v1573, %v1714
        %v1716 = vpop.f32.mrb[0].mxu0
        %1717 = vmatprep.mubr.f32.mxu0 0.0
        %1718 = vmatmul.mubr.f32.gmra.mrb[0].mxu0 %v667
        %v1719 = vpop.f32.mrb[0].mxu0
        %v1720 = vadd.f32 %v1574, %v1719
        %v1721 = vpop.f32.mrb[0].mxu0
        %1722 = vdwg.mxu0
        %v1723 = vlaneseq
        %v1724 = vshrl.u32 %v1723, 7
        %v1725 = vsub.s32 5, %v1724
        %v1726 = vrot.slane %v1554, %v1725
        %v1727 = vmul.f32 %v1378, %v1726
        %v1728 = vmul.f32 %v1379, %v1726
        %v1729 = vmul.f32 %v1380, %v1726
        %v1730 = vmul.f32 %v1381, %v1726
        %v1731 = vmul.f32 %v1382, %v1726
        %v1732 = vmul.f32 %v1383, %v1726
        %v1733 = vmul.f32 %v1384, %v1726
        %v1734 = vmul.f32 %v1385, %v1726
        %v1735 = vmul.f32 %v1386, %v1726
        %v1736 = vmul.f32 %v1387, %v1726
        %v1737 = vmul.f32 %v1388, %v1726
        %v1738 = vmul.f32 %v1389, %v1726
        %v1739 = vmul.f32 %v1390, %v1726
        %v1740 = vmul.f32 %v1391, %v1726
        %v1741 = vmul.f32 %v1392, %v1726
        %v1742 = vmul.f32 %v1393, %v1726
        %v1743 = vadd.f32 %v1645, %v1727
        %v1744 = vadd.f32 %v1650, %v1728
        %v1745 = vadd.f32 %v1655, %v1729
        %v1746 = vadd.f32 %v1660, %v1730
        %v1747 = vadd.f32 %v1665, %v1731
        %v1748 = vadd.f32 %v1670, %v1732
        %v1749 = vadd.f32 %v1675, %v1733
        %v1750 = vadd.f32 %v1680, %v1734
        %v1751 = vadd.f32 %v1685, %v1735
        %v1752 = vadd.f32 %v1690, %v1736
        %v1753 = vadd.f32 %v1695, %v1737
        %v1754 = vadd.f32 %v1700, %v1738
        %v1755 = vadd.f32 %v1705, %v1739
        %v1756 = vadd.f32 %v1710, %v1740
        %v1757 = vadd.f32 %v1715, %v1741
        %v1758 = vadd.f32 %v1720, %v1742
        %v1759 = vld [vmem:[%s6] sm:$0x1]
        %v1761 = vlaneseq
        %v1762 = vshrl.u32 %v1761, 7
        %v1763 = vsub.s32 0, %v1762
        %v1764 = vrot.slane %v1759, %v1763
        %v1766 = vadd.f32 %v1743, %v1764
        %v1767 = vadd.f32 %v1744, %v1764
        %v1768 = vadd.f32 %v1745, %v1764
        %v1769 = vadd.f32 %v1746, %v1764
        %v1770 = vadd.f32 %v1747, %v1764
        %v1771 = vadd.f32 %v1748, %v1764
        %v1772 = vadd.f32 %v1749, %v1764
        %v1773 = vadd.f32 %v1750, %v1764
        %v1774 = vadd.f32 %v1751, %v1764
        %v1775 = vadd.f32 %v1752, %v1764
        %v1776 = vadd.f32 %v1753, %v1764
        %v1777 = vadd.f32 %v1754, %v1764
        %v1778 = vadd.f32 %v1755, %v1764
        %v1779 = vadd.f32 %v1756, %v1764
        %v1780 = vadd.f32 %v1757, %v1764
        %v1781 = vadd.f32 %v1758, %v1764
        %v1782 = vtanh.pop %v1766
        %v1783 = vtanh.pop %v1767
        %v1784 = vtanh.pop %v1768
        %v1785 = vtanh.pop %v1769
        %v1786 = vtanh.pop %v1770
        %v1787 = vtanh.pop %v1771
        %v1788 = vtanh.pop %v1772
        %v1789 = vtanh.pop %v1773
        %v1790 = vtanh.pop %v1774
        %v1791 = vtanh.pop %v1775
        %v1792 = vtanh.pop %v1776
        %v1793 = vtanh.pop %v1777
        %v1794 = vtanh.pop %v1778
        %v1795 = vtanh.pop %v1779
        %v1796 = vtanh.pop %v1780
        %v1797 = vtanh.pop %v1781
        %v1798 = vld [vmem:[%s7] sm:$0xff]
        %v1799 = vld [vmem:[%s7 + $0x8] sm:$0x3]
        %v1800 = vld [vmem:[%s8] sm:$0x1]
        %v1802 = vlaneseq
        %v1803 = vshrl.u32 %v1802, 7
        %v1804 = vsub.s32 0, %v1803
        %v1805 = vrot.slane %v1800, %v1804
        %vm1807 = vcmask 80896
        %v1809 = vsel %vm1807, %v1782, 0
        %v1812 = vsel %vm1807, %v1783, 0
        %v1815 = vsel %vm1807, %v1784, 0
        %v1818 = vsel %vm1807, %v1785, 0
        %v1821 = vsel %vm1807, %v1786, 0
        %v1824 = vsel %vm1807, %v1787, 0
        %v1827 = vsel %vm1807, %v1788, 0
        %v1830 = vsel %vm1807, %v1789, 0
        %v1833 = vsel %vm1807, %v1790, 0
        %v1836 = vsel %vm1807, %v1791, 0
        %v1839 = vsel %vm1807, %v1792, 0
        %v1842 = vsel %vm1807, %v1793, 0
        %v1845 = vsel %vm1807, %v1794, 0
        %v1848 = vsel %vm1807, %v1795, 0
        %v1851 = vsel %vm1807, %v1796, 0
        %v1854 = vsel %vm1807, %v1797, 0
        %vm1856 = vcmask 1041408
        %v1858 = vsel %vm1856, %v1799, 0
        %1860 = vmatprep.subr.mxu0 0.0
        %1861 = vmatpush1.msra.mxu0 %v1798
        %1862 = vmatprep.subr.mxu0 0.0
        %1863 = vmatpush1.msra.mxu0 %v1858
        %1864 = vmatprep.subr.mxu0 0.0
        %1865 = vmatpush1.msra.mxu0 0.0
        %1866 = vmatprep.subr.mxu0 0.0
        %1867 = vmatpush1.msra.mxu0 0.0
        %1868 = vmatprep.subr.mxu0 0.0
        %1869 = vmatpush1.msra.mxu0 0.0
        %1870 = vmatprep.subr.mxu0 0.0
        %1871 = vmatpush1.msra.mxu0 0.0
        %1872 = vmatprep.subr.mxu0 0.0
        %1873 = vmatpush1.msra.mxu0 0.0
        %1874 = vmatprep.subr.mxu0 0.0
        %1875 = vmatpush1.msra.mxu0 0.0
        %1876 = vmatprep.subr.mxu0 0.0
        %1877 = vmatpush1.msra.mxu0 0.0
        %1878 = vmatprep.subr.mxu0 0.0
        %1879 = vmatpush1.msra.mxu0 0.0
        %1880 = vmatprep.subr.mxu0 0.0
        %1881 = vmatpush1.msra.mxu0 0.0
        %1882 = vmatprep.subr.mxu0 0.0
        %1883 = vmatpush1.msra.mxu0 0.0
        %1884 = vmatprep.subr.mxu0 0.0
        %1885 = vmatpush1.msra.mxu0 0.0
        %1886 = vmatprep.subr.mxu0 0.0
        %1887 = vmatpush1.msra.mxu0 0.0
        %1888 = vmatprep.subr.mxu0 0.0
        %1889 = vmatpush1.msra.mxu0 0.0
        %1890 = vmatprep.subr.mxu0 0.0
        %1891 = vmatpush1.msra.mxu0 0.0
        %1892 = vmatprep.subr.mxu0 0.0
        %1893 = vmatpush1.msra.mxu0 0.0
        %1894 = vmatprep.subr.mxu0 0.0
        %1895 = vmatpush1.msra.mxu0 0.0
        %1896 = vmatprep.subr.mxu0 0.0
        %1897 = vmatpush1.msra.mxu0 0.0
        %1898 = vmatprep.subr.mxu0 0.0
        %1899 = vmatpush1.msra.mxu0 0.0
        %1900 = vmatprep.subr.mxu0 0.0
        %1901 = vmatpush1.msra.mxu0 0.0
        %1902 = vmatprep.subr.mxu0 0.0
        %1903 = vmatpush1.msra.mxu0 0.0
        %1904 = vmatprep.subr.mxu0 0.0
        %1905 = vmatpush1.msra.mxu0 0.0
        %1906 = vmatprep.subr.mxu0 0.0
        %1907 = vmatpush1.msra.mxu0 0.0
        %1908 = vmatprep.subr.mxu0 0.0
        %1909 = vmatpush1.msra.mxu0 0.0
        %1910 = vmatprep.subr.mxu0 0.0
        %1911 = vmatpush1.msra.mxu0 0.0
        %1912 = vmatprep.subr.mxu0 0.0
        %1913 = vmatpush1.msra.mxu0 0.0
        %1914 = vmatprep.subr.mxu0 0.0
        %1915 = vmatpush1.msra.mxu0 0.0
        %1916 = vmatprep.subr.mxu0 0.0
        %1917 = vmatpush1.msra.mxu0 0.0
        %1918 = vmatprep.subr.mxu0 0.0
        %1919 = vmatpush1.msra.mxu0 0.0
        %1920 = vmatprep.subr.mxu0 0.0
        %1921 = vmatpush1.msra.mxu0 0.0
        %1922 = vmatprep.subr.mxu0 0.0
        %1923 = vmatpush1.msra.mxu0 0.0
        %1924 = vmatprep.mubr.f32.mxu0 0.0
        %1925 = vmatmul.mubr.f32.gmra.mrb[0].mxu0 %v1809
        %v1926 = vpop.f32.mrb[0].mxu0
        %v1927 = vadd.f32 %v1805, %v1926
        %v1928 = vpop.f32.mrb[0].mxu0
        %1929 = vmatprep.mubr.f32.mxu0 0.0
        %1930 = vmatmul.mubr.f32.gmra.mrb[0].mxu0 %v1812
        %v1931 = vpop.f32.mrb[0].mxu0
        %v1932 = vadd.f32 %v1805, %v1931
        %v1933 = vpop.f32.mrb[0].mxu0
        %1934 = vmatprep.mubr.f32.mxu0 0.0
        %1935 = vmatmul.mubr.f32.gmra.mrb[0].mxu0 %v1815
        %v1936 = vpop.f32.mrb[0].mxu0
        %v1937 = vadd.f32 %v1805, %v1936
        %v1938 = vpop.f32.mrb[0].mxu0
        %1939 = vmatprep.mubr.f32.mxu0 0.0
        %1940 = vmatmul.mubr.f32.gmra.mrb[0].mxu0 %v1818
        %v1941 = vpop.f32.mrb[0].mxu0
        %v1942 = vadd.f32 %v1805, %v1941
        %v1943 = vpop.f32.mrb[0].mxu0
        %1944 = vmatprep.mubr.f32.mxu0 0.0
        %1945 = vmatmul.mubr.f32.gmra.mrb[0].mxu0 %v1821
        %v1946 = vpop.f32.mrb[0].mxu0
        %v1947 = vadd.f32 %v1805, %v1946
        %v1948 = vpop.f32.mrb[0].mxu0
        %1949 = vmatprep.mubr.f32.mxu0 0.0
        %1950 = vmatmul.mubr.f32.gmra.mrb[0].mxu0 %v1824
        %v1951 = vpop.f32.mrb[0].mxu0
        %v1952 = vadd.f32 %v1805, %v1951
        %v1953 = vpop.f32.mrb[0].mxu0
        %1954 = vmatprep.mubr.f32.mxu0 0.0
        %1955 = vmatmul.mubr.f32.gmra.mrb[0].mxu0 %v1827
        %v1956 = vpop.f32.mrb[0].mxu0
        %v1957 = vadd.f32 %v1805, %v1956
        %v1958 = vpop.f32.mrb[0].mxu0
        %1959 = vmatprep.mubr.f32.mxu0 0.0
        %1960 = vmatmul.mubr.f32.gmra.mrb[0].mxu0 %v1830
        %v1961 = vpop.f32.mrb[0].mxu0
        %v1962 = vadd.f32 %v1805, %v1961
        %v1963 = vpop.f32.mrb[0].mxu0
        %1964 = vmatprep.mubr.f32.mxu0 0.0
        %1965 = vmatmul.mubr.f32.gmra.mrb[0].mxu0 %v1833
        %v1966 = vpop.f32.mrb[0].mxu0
        %v1967 = vadd.f32 %v1805, %v1966
        %v1968 = vpop.f32.mrb[0].mxu0
        %1969 = vmatprep.mubr.f32.mxu0 0.0
        %1970 = vmatmul.mubr.f32.gmra.mrb[0].mxu0 %v1836
        %v1971 = vpop.f32.mrb[0].mxu0
        %v1972 = vadd.f32 %v1805, %v1971
        %v1973 = vpop.f32.mrb[0].mxu0
        %1974 = vmatprep.mubr.f32.mxu0 0.0
        %1975 = vmatmul.mubr.f32.gmra.mrb[0].mxu0 %v1839
        %v1976 = vpop.f32.mrb[0].mxu0
        %v1977 = vadd.f32 %v1805, %v1976
        %v1978 = vpop.f32.mrb[0].mxu0
        %1979 = vmatprep.mubr.f32.mxu0 0.0
        %1980 = vmatmul.mubr.f32.gmra.mrb[0].mxu0 %v1842
        %v1981 = vpop.f32.mrb[0].mxu0
        %v1982 = vadd.f32 %v1805, %v1981
        %v1983 = vpop.f32.mrb[0].mxu0
        %1984 = vmatprep.mubr.f32.mxu0 0.0
        %1985 = vmatmul.mubr.f32.gmra.mrb[0].mxu0 %v1845
        %v1986 = vpop.f32.mrb[0].mxu0
        %v1987 = vadd.f32 %v1805, %v1986
        %v1988 = vpop.f32.mrb[0].mxu0
        %1989 = vmatprep.mubr.f32.mxu0 0.0
        %1990 = vmatmul.mubr.f32.gmra.mrb[0].mxu0 %v1848
        %v1991 = vpop.f32.mrb[0].mxu0
        %v1992 = vadd.f32 %v1805, %v1991
        %v1993 = vpop.f32.mrb[0].mxu0
        %1994 = vmatprep.mubr.f32.mxu0 0.0
        %1995 = vmatmul.mubr.f32.gmra.mrb[0].mxu0 %v1851
        %v1996 = vpop.f32.mrb[0].mxu0
        %v1997 = vadd.f32 %v1805, %v1996
        %v1998 = vpop.f32.mrb[0].mxu0
        %1999 = vmatprep.mubr.f32.mxu0 0.0
        %2000 = vmatmul.mubr.f32.gmra.mrb[0].mxu0 %v1854
        %v2001 = vpop.f32.mrb[0].mxu0
        %v2002 = vadd.f32 %v1805, %v2001
        %v2003 = vpop.f32.mrb[0].mxu0
        %2004 = vdwg.mxu0
        %vm2005 = vcmask 23552
        %v2006 = vsel %vm2005, %v1927, -inf
        %2007 = vmax.xlane.f32.xlu0 %v2006
        %v2008 = vpop.xlane.xlu0 %2007
        %v2009 = vsel %vm2005, %v1932, -inf
        %2010 = vmax.xlane.f32.xlu0 %v2009
        %v2011 = vpop.xlane.xlu0 %2010
        %v2012 = vsel %vm2005, %v1937, -inf
        %2013 = vmax.xlane.f32.xlu0 %v2012
        %v2014 = vpop.xlane.xlu0 %2013
        %v2015 = vsel %vm2005, %v1942, -inf
        %2016 = vmax.xlane.f32.xlu0 %v2015
        %v2017 = vpop.xlane.xlu0 %2016
        %v2018 = vsel %vm2005, %v1947, -inf
        %2019 = vmax.xlane.f32.xlu0 %v2018
        %v2020 = vpop.xlane.xlu0 %2019
        %v2021 = vsel %vm2005, %v1952, -inf
        %2022 = vmax.xlane.f32.xlu0 %v2021
        %v2023 = vpop.xlane.xlu0 %2022
        %v2024 = vsel %vm2005, %v1957, -inf
        %2025 = vmax.xlane.f32.xlu0 %v2024
        %v2026 = vpop.xlane.xlu0 %2025
        %v2027 = vsel %vm2005, %v1962, -inf
        %2028 = vmax.xlane.f32.xlu0 %v2027
        %v2029 = vpop.xlane.xlu0 %2028
        %v2030 = vsel %vm2005, %v1967, -inf
        %2031 = vmax.xlane.f32.xlu0 %v2030
        %v2032 = vpop.xlane.xlu0 %2031
        %v2033 = vsel %vm2005, %v1972, -inf
        %2034 = vmax.xlane.f32.xlu0 %v2033
        %v2035 = vpop.xlane.xlu0 %2034
        %v2036 = vsel %vm2005, %v1977, -inf
        %2037 = vmax.xlane.f32.xlu0 %v2036
        %v2038 = vpop.xlane.xlu0 %2037
        %v2039 = vsel %vm2005, %v1982, -inf
        %2040 = vmax.xlane.f32.xlu0 %v2039
        %v2041 = vpop.xlane.xlu0 %2040
        %v2042 = vsel %vm2005, %v1987, -inf
        %2043 = vmax.xlane.f32.xlu0 %v2042
        %v2044 = vpop.xlane.xlu0 %2043
        %v2045 = vsel %vm2005, %v1992, -inf
        %2046 = vmax.xlane.f32.xlu0 %v2045
        %v2047 = vpop.xlane.xlu0 %2046
        %v2048 = vsel %vm2005, %v1997, -inf
        %2049 = vmax.xlane.f32.xlu0 %v2048
        %v2050 = vpop.xlane.xlu0 %2049
        %v2051 = vsel %vm2005, %v2002, -inf
        %2052 = vmax.xlane.f32.xlu0 %v2051
        %v2053 = vpop.xlane.xlu0 %2052
        %v2054 = vsub.f32 %v1927, %v2008
        %v2055 = vsub.f32 %v1932, %v2011
        %v2056 = vsub.f32 %v1937, %v2014
        %v2057 = vsub.f32 %v1942, %v2017
        %v2058 = vsub.f32 %v1947, %v2020
        %v2059 = vsub.f32 %v1952, %v2023
        %v2060 = vsub.f32 %v1957, %v2026
        %v2061 = vsub.f32 %v1962, %v2029
        %v2062 = vsub.f32 %v1967, %v2032
        %v2063 = vsub.f32 %v1972, %v2035
        %v2064 = vsub.f32 %v1977, %v2038
        %v2065 = vsub.f32 %v1982, %v2041
        %v2066 = vsub.f32 %v1987, %v2044
        %v2067 = vsub.f32 %v1992, %v2047
        %v2068 = vsub.f32 %v1997, %v2050
        %v2069 = vsub.f32 %v2002, %v2053
        %v2070 = vmul.f32 %v2054, 1.442695
        %v2071 = vpow.pop %v2070
        %v2072 = vmul.f32 %v2055, 1.442695
        %v2073 = vpow.pop %v2072
        %v2074 = vmul.f32 %v2056, 1.442695
        %v2075 = vpow.pop %v2074
        %v2076 = vmul.f32 %v2057, 1.442695
        %v2077 = vpow.pop %v2076
        %v2078 = vmul.f32 %v2058, 1.442695
        %v2079 = vpow.pop %v2078
        %v2080 = vmul.f32 %v2059, 1.442695
        %v2081 = vpow.pop %v2080
        %v2082 = vmul.f32 %v2060, 1.442695
        %v2083 = vpow.pop %v2082
        %v2084 = vmul.f32 %v2061, 1.442695
        %v2085 = vpow.pop %v2084
        %v2086 = vmul.f32 %v2062, 1.442695
        %v2087 = vpow.pop %v2086
        %v2088 = vmul.f32 %v2063, 1.442695
        %v2089 = vpow.pop %v2088
        %v2090 = vmul.f32 %v2064, 1.442695
        %v2091 = vpow.pop %v2090
        %v2092 = vmul.f32 %v2065, 1.442695
        %v2093 = vpow.pop %v2092
        %v2094 = vmul.f32 %v2066, 1.442695
        %v2095 = vpow.pop %v2094
        %v2096 = vmul.f32 %v2067, 1.442695
        %v2097 = vpow.pop %v2096
        %v2098 = vmul.f32 %v2068, 1.442695
        %v2099 = vpow.pop %v2098
        %v2100 = vmul.f32 %v2069, 1.442695
        %v2101 = vpow.pop %v2100
        %v2102 = vsel %vm2005, %v2071, 0.0
        %2103 = vadd.xlane.f32.xlu0 %v2102
        %v2104 = vpop.xlane.xlu0 %2103
        %v2105 = vsel %vm2005, %v2073, 0.0
        %2106 = vadd.xlane.f32.xlu0 %v2105
        %v2107 = vpop.xlane.xlu0 %2106
        %v2108 = vsel %vm2005, %v2075, 0.0
        %2109 = vadd.xlane.f32.xlu0 %v2108
        %v2110 = vpop.xlane.xlu0 %2109
        %v2111 = vsel %vm2005, %v2077, 0.0
        %2112 = vadd.xlane.f32.xlu0 %v2111
        %v2113 = vpop.xlane.xlu0 %2112
        %v2114 = vsel %vm2005, %v2079, 0.0
        %2115 = vadd.xlane.f32.xlu0 %v2114
        %v2116 = vpop.xlane.xlu0 %2115
        %v2117 = vsel %vm2005, %v2081, 0.0
        %2118 = vadd.xlane.f32.xlu0 %v2117
        %v2119 = vpop.xlane.xlu0 %2118
        %v2120 = vsel %vm2005, %v2083, 0.0
        %2121 = vadd.xlane.f32.xlu0 %v2120
        %v2122 = vpop.xlane.xlu0 %2121
        %v2123 = vsel %vm2005, %v2085, 0.0
        %2124 = vadd.xlane.f32.xlu0 %v2123
        %v2125 = vpop.xlane.xlu0 %2124
        %v2126 = vsel %vm2005, %v2087, 0.0
        %2127 = vadd.xlane.f32.xlu0 %v2126
        %v2128 = vpop.xlane.xlu0 %2127
        %v2129 = vsel %vm2005, %v2089, 0.0
        %2130 = vadd.xlane.f32.xlu0 %v2129
        %v2131 = vpop.xlane.xlu0 %2130
        %v2132 = vsel %vm2005, %v2091, 0.0
        %2133 = vadd.xlane.f32.xlu0 %v2132
        %v2134 = vpop.xlane.xlu0 %2133
        %v2135 = vsel %vm2005, %v2093, 0.0
        %2136 = vadd.xlane.f32.xlu0 %v2135
        %v2137 = vpop.xlane.xlu0 %2136
        %v2138 = vsel %vm2005, %v2095, 0.0
        %2139 = vadd.xlane.f32.xlu0 %v2138
        %v2140 = vpop.xlane.xlu0 %2139
        %v2141 = vsel %vm2005, %v2097, 0.0
        %2142 = vadd.xlane.f32.xlu0 %v2141
        %v2143 = vpop.xlane.xlu0 %2142
        %v2144 = vsel %vm2005, %v2099, 0.0
        %2145 = vadd.xlane.f32.xlu0 %v2144
        %v2146 = vpop.xlane.xlu0 %2145
        %v2147 = vsel %vm2005, %v2101, 0.0
        %2148 = vadd.xlane.f32.xlu0 %v2147
        %v2149 = vpop.xlane.xlu0 %2148
        %v2150 = vrcp.pop %v2104
        %v2151 = vrcp.pop %v2107
        %v2152 = vrcp.pop %v2110
        %v2153 = vrcp.pop %v2113
        %v2154 = vrcp.pop %v2116
        %v2155 = vrcp.pop %v2119
        %v2156 = vrcp.pop %v2122
        %v2157 = vrcp.pop %v2125
        %v2158 = vrcp.pop %v2128
        %v2159 = vrcp.pop %v2131
        %v2160 = vrcp.pop %v2134
        %v2161 = vrcp.pop %v2137
        %v2162 = vrcp.pop %v2140
        %v2163 = vrcp.pop %v2143
        %v2164 = vrcp.pop %v2146
        %v2165 = vrcp.pop %v2149
        %v2166 = vmul.f32 %v2071, %v2150
        %v2167 = vmul.f32 %v2073, %v2151
        %v2168 = vmul.f32 %v2075, %v2152
        %v2169 = vmul.f32 %v2077, %v2153
        %v2170 = vmul.f32 %v2079, %v2154
        %v2171 = vmul.f32 %v2081, %v2155
        %v2172 = vmul.f32 %v2083, %v2156
        %v2173 = vmul.f32 %v2085, %v2157
        %v2174 = vmul.f32 %v2087, %v2158
        %v2175 = vmul.f32 %v2089, %v2159
        %v2176 = vmul.f32 %v2091, %v2160
        %v2177 = vmul.f32 %v2093, %v2161
        %v2178 = vmul.f32 %v2095, %v2162
        %v2179 = vmul.f32 %v2097, %v2163
        %v2180 = vmul.f32 %v2099, %v2164
        %v2181 = vmul.f32 %v2101, %v2165
        %v2182 = vlaneseq
        %v2183 = vand.u32 %v2182, 127
        %v2184 = vlaneseq
        %v2185 = vshrl.u32 %v2184, 7
        %vm2186 = vcmp.eq.s32.totalorder %v2183, %v2185
        %v2187 = vsel %vm2186, 1, 0
        %v2188 = vcvt.s32.f32 %v2187
        %v2189 = vadd.s32 %v2185, 6
        %vm2190 = vcmp.eq.s32.totalorder %v2183, %v2189
        %v2191 = vsel %vm2190, 1, 0
        %v2192 = vcvt.s32.f32 %v2191
        %vm2193 = vcmp.eq.s32.totalorder %v2183, 4
        %v2194 = vsel %vm2193, 1, 0
        %v2195 = vcvt.s32.f32 %v2194
        %vm2196 = vcmp.eq.s32.totalorder %v2183, 5
        %v2197 = vsel %vm2196, 1, 0
        %v2198 = vcvt.s32.f32 %v2197
        %v2200 = vsel %vm2005, %v2166, 0
        %v2203 = vsel %vm2005, %v2167, 0
        %v2206 = vsel %vm2005, %v2168, 0
        %v2209 = vsel %vm2005, %v2169, 0
        %v2212 = vsel %vm2005, %v2170, 0
        %v2215 = vsel %vm2005, %v2171, 0
        %v2218 = vsel %vm2005, %v2172, 0
        %v2221 = vsel %vm2005, %v2173, 0
        %v2224 = vsel %vm2005, %v2174, 0
        %v2227 = vsel %vm2005, %v2175, 0
        %v2230 = vsel %vm2005, %v2176, 0
        %v2233 = vsel %vm2005, %v2177, 0
        %v2236 = vsel %vm2005, %v2178, 0
        %v2239 = vsel %vm2005, %v2179, 0
        %v2242 = vsel %vm2005, %v2180, 0
        %v2245 = vsel %vm2005, %v2181, 0
        %vm2247 = vcmask 1042432
        %v2249 = vsel %vm2247, %v2192, 0
        %2251 = vmatprep.subr.mxu0 0.0
        %2252 = vmatpush1.msra.mxu0 %v2249
        %2253 = vmatprep.subr.mxu0 0.0
        %2254 = vmatpush1.msra.mxu0 0.0
        %2255 = vmatprep.subr.mxu0 0.0
        %2256 = vmatpush1.msra.mxu0 0.0
        %2257 = vmatprep.subr.mxu0 0.0
        %2258 = vmatpush1.msra.mxu0 0.0
        %2259 = vmatprep.subr.mxu0 0.0
        %2260 = vmatpush1.msra.mxu0 0.0
        %2261 = vmatprep.subr.mxu0 0.0
        %2262 = vmatpush1.msra.mxu0 0.0
        %2263 = vmatprep.subr.mxu0 0.0
        %2264 = vmatpush1.msra.mxu0 0.0
        %2265 = vmatprep.subr.mxu0 0.0
        %2266 = vmatpush1.msra.mxu0 0.0
        %2267 = vmatprep.subr.mxu0 0.0
        %2268 = vmatpush1.msra.mxu0 0.0
        %2269 = vmatprep.subr.mxu0 0.0
        %2270 = vmatpush1.msra.mxu0 0.0
        %2271 = vmatprep.subr.mxu0 0.0
        %2272 = vmatpush1.msra.mxu0 0.0
        %2273 = vmatprep.subr.mxu0 0.0
        %2274 = vmatpush1.msra.mxu0 0.0
        %2275 = vmatprep.subr.mxu0 0.0
        %2276 = vmatpush1.msra.mxu0 0.0
        %2277 = vmatprep.subr.mxu0 0.0
        %2278 = vmatpush1.msra.mxu0 0.0
        %2279 = vmatprep.subr.mxu0 0.0
        %2280 = vmatpush1.msra.mxu0 0.0
        %2281 = vmatprep.subr.mxu0 0.0
        %2282 = vmatpush1.msra.mxu0 0.0
        %2283 = vmatprep.subr.mxu0 0.0
        %2284 = vmatpush1.msra.mxu0 0.0
        %2285 = vmatprep.subr.mxu0 0.0
        %2286 = vmatpush1.msra.mxu0 0.0
        %2287 = vmatprep.subr.mxu0 0.0
        %2288 = vmatpush1.msra.mxu0 0.0
        %2289 = vmatprep.subr.mxu0 0.0
        %2290 = vmatpush1.msra.mxu0 0.0
        %2291 = vmatprep.subr.mxu0 0.0
        %2292 = vmatpush1.msra.mxu0 0.0
        %2293 = vmatprep.subr.mxu0 0.0
        %2294 = vmatpush1.msra.mxu0 0.0
        %2295 = vmatprep.subr.mxu0 0.0
        %2296 = vmatpush1.msra.mxu0 0.0
        %2297 = vmatprep.subr.mxu0 0.0
        %2298 = vmatpush1.msra.mxu0 0.0
        %2299 = vmatprep.subr.mxu0 0.0
        %2300 = vmatpush1.msra.mxu0 0.0
        %2301 = vmatprep.subr.mxu0 0.0
        %2302 = vmatpush1.msra.mxu0 0.0
        %2303 = vmatprep.subr.mxu0 0.0
        %2304 = vmatpush1.msra.mxu0 0.0
        %2305 = vmatprep.subr.mxu0 0.0
        %2306 = vmatpush1.msra.mxu0 0.0
        %2307 = vmatprep.subr.mxu0 0.0
        %2308 = vmatpush1.msra.mxu0 0.0
        %2309 = vmatprep.subr.mxu0 0.0
        %2310 = vmatpush1.msra.mxu0 0.0
        %2311 = vmatprep.subr.mxu0 0.0
        %2312 = vmatpush1.msra.mxu0 0.0
        %2313 = vmatprep.subr.mxu0 0.0
        %2314 = vmatpush1.msra.mxu0 0.0
        %2315 = vmatprep.mubr.f32.mxu0 0.0
        %2316 = vmatmul.mubr.f32.gmra.mrb[0].mxu0 %v2200
        %v2317 = vpop.f32.mrb[0].mxu0
        %v2318 = vadd.f32 0.0, %v2317
        %v2319 = vpop.f32.mrb[0].mxu0
        %2320 = vmatprep.mubr.f32.mxu0 0.0
        %2321 = vmatmul.mubr.f32.gmra.mrb[0].mxu0 %v2203
        %v2322 = vpop.f32.mrb[0].mxu0
        %v2323 = vadd.f32 0.0, %v2322
        %v2324 = vpop.f32.mrb[0].mxu0
        %2325 = vmatprep.mubr.f32.mxu0 0.0
        %2326 = vmatmul.mubr.f32.gmra.mrb[0].mxu0 %v2206
        %v2327 = vpop.f32.mrb[0].mxu0
        %v2328 = vadd.f32 0.0, %v2327
        %v2329 = vpop.f32.mrb[0].mxu0
        %2330 = vmatprep.mubr.f32.mxu0 0.0
        %2331 = vmatmul.mubr.f32.gmra.mrb[0].mxu0 %v2209
        %v2332 = vpop.f32.mrb[0].mxu0
        %v2333 = vadd.f32 0.0, %v2332
        %v2334 = vpop.f32.mrb[0].mxu0
        %2335 = vmatprep.mubr.f32.mxu0 0.0
        %2336 = vmatmul.mubr.f32.gmra.mrb[0].mxu0 %v2212
        %v2337 = vpop.f32.mrb[0].mxu0
        %v2338 = vadd.f32 0.0, %v2337
        %v2339 = vpop.f32.mrb[0].mxu0
        %2340 = vmatprep.mubr.f32.mxu0 0.0
        %2341 = vmatmul.mubr.f32.gmra.mrb[0].mxu0 %v2215
        %v2342 = vpop.f32.mrb[0].mxu0
        %v2343 = vadd.f32 0.0, %v2342
        %v2344 = vpop.f32.mrb[0].mxu0
        %2345 = vmatprep.mubr.f32.mxu0 0.0
        %2346 = vmatmul.mubr.f32.gmra.mrb[0].mxu0 %v2218
        %v2347 = vpop.f32.mrb[0].mxu0
        %v2348 = vadd.f32 0.0, %v2347
        %v2349 = vpop.f32.mrb[0].mxu0
        %2350 = vmatprep.mubr.f32.mxu0 0.0
        %2351 = vmatmul.mubr.f32.gmra.mrb[0].mxu0 %v2221
        %v2352 = vpop.f32.mrb[0].mxu0
        %v2353 = vadd.f32 0.0, %v2352
        %v2354 = vpop.f32.mrb[0].mxu0
        %2355 = vmatprep.mubr.f32.mxu0 0.0
        %2356 = vmatmul.mubr.f32.gmra.mrb[0].mxu0 %v2224
        %v2357 = vpop.f32.mrb[0].mxu0
        %v2358 = vadd.f32 0.0, %v2357
        %v2359 = vpop.f32.mrb[0].mxu0
        %2360 = vmatprep.mubr.f32.mxu0 0.0
        %2361 = vmatmul.mubr.f32.gmra.mrb[0].mxu0 %v2227
        %v2362 = vpop.f32.mrb[0].mxu0
        %v2363 = vadd.f32 0.0, %v2362
        %v2364 = vpop.f32.mrb[0].mxu0
        %2365 = vmatprep.mubr.f32.mxu0 0.0
        %2366 = vmatmul.mubr.f32.gmra.mrb[0].mxu0 %v2230
        %v2367 = vpop.f32.mrb[0].mxu0
        %v2368 = vadd.f32 0.0, %v2367
        %v2369 = vpop.f32.mrb[0].mxu0
        %2370 = vmatprep.mubr.f32.mxu0 0.0
        %2371 = vmatmul.mubr.f32.gmra.mrb[0].mxu0 %v2233
        %v2372 = vpop.f32.mrb[0].mxu0
        %v2373 = vadd.f32 0.0, %v2372
        %v2374 = vpop.f32.mrb[0].mxu0
        %2375 = vmatprep.mubr.f32.mxu0 0.0
        %2376 = vmatmul.mubr.f32.gmra.mrb[0].mxu0 %v2236
        %v2377 = vpop.f32.mrb[0].mxu0
        %v2378 = vadd.f32 0.0, %v2377
        %v2379 = vpop.f32.mrb[0].mxu0
        %2380 = vmatprep.mubr.f32.mxu0 0.0
        %2381 = vmatmul.mubr.f32.gmra.mrb[0].mxu0 %v2239
        %v2382 = vpop.f32.mrb[0].mxu0
        %v2383 = vadd.f32 0.0, %v2382
        %v2384 = vpop.f32.mrb[0].mxu0
        %2385 = vmatprep.mubr.f32.mxu0 0.0
        %2386 = vmatmul.mubr.f32.gmra.mrb[0].mxu0 %v2242
        %v2387 = vpop.f32.mrb[0].mxu0
        %v2388 = vadd.f32 0.0, %v2387
        %v2389 = vpop.f32.mrb[0].mxu0
        %2390 = vmatprep.mubr.f32.mxu0 0.0
        %2391 = vmatmul.mubr.f32.gmra.mrb[0].mxu0 %v2245
        %v2392 = vpop.f32.mrb[0].mxu0
        %v2393 = vadd.f32 0.0, %v2392
        %v2394 = vpop.f32.mrb[0].mxu0
        %2395 = vdwg.mxu0
        %v2397 = vsel %vm669, %v2188, 0
        %2399 = vmatprep.subr.mxu0 0.0
        %2400 = vmatpush1.msra.mxu0 %v2397
        %2401 = vmatprep.subr.mxu0 0.0
        %2402 = vmatpush1.msra.mxu0 0.0
        %2403 = vmatprep.subr.mxu0 0.0
        %2404 = vmatpush1.msra.mxu0 0.0
        %2405 = vmatprep.subr.mxu0 0.0
        %2406 = vmatpush1.msra.mxu0 0.0
        %2407 = vmatprep.subr.mxu0 0.0
        %2408 = vmatpush1.msra.mxu0 0.0
        %2409 = vmatprep.subr.mxu0 0.0
        %2410 = vmatpush1.msra.mxu0 0.0
        %2411 = vmatprep.subr.mxu0 0.0
        %2412 = vmatpush1.msra.mxu0 0.0
        %2413 = vmatprep.subr.mxu0 0.0
        %2414 = vmatpush1.msra.mxu0 0.0
        %2415 = vmatprep.subr.mxu0 0.0
        %2416 = vmatpush1.msra.mxu0 0.0
        %2417 = vmatprep.subr.mxu0 0.0
        %2418 = vmatpush1.msra.mxu0 0.0
        %2419 = vmatprep.subr.mxu0 0.0
        %2420 = vmatpush1.msra.mxu0 0.0
        %2421 = vmatprep.subr.mxu0 0.0
        %2422 = vmatpush1.msra.mxu0 0.0
        %2423 = vmatprep.subr.mxu0 0.0
        %2424 = vmatpush1.msra.mxu0 0.0
        %2425 = vmatprep.subr.mxu0 0.0
        %2426 = vmatpush1.msra.mxu0 0.0
        %2427 = vmatprep.subr.mxu0 0.0
        %2428 = vmatpush1.msra.mxu0 0.0
        %2429 = vmatprep.subr.mxu0 0.0
        %2430 = vmatpush1.msra.mxu0 0.0
        %2431 = vmatprep.subr.mxu0 0.0
        %2432 = vmatpush1.msra.mxu0 0.0
        %2433 = vmatprep.subr.mxu0 0.0
        %2434 = vmatpush1.msra.mxu0 0.0
        %2435 = vmatprep.subr.mxu0 0.0
        %2436 = vmatpush1.msra.mxu0 0.0
        %2437 = vmatprep.subr.mxu0 0.0
        %2438 = vmatpush1.msra.mxu0 0.0
        %2439 = vmatprep.subr.mxu0 0.0
        %2440 = vmatpush1.msra.mxu0 0.0
        %2441 = vmatprep.subr.mxu0 0.0
        %2442 = vmatpush1.msra.mxu0 0.0
        %2443 = vmatprep.subr.mxu0 0.0
        %2444 = vmatpush1.msra.mxu0 0.0
        %2445 = vmatprep.subr.mxu0 0.0
        %2446 = vmatpush1.msra.mxu0 0.0
        %2447 = vmatprep.subr.mxu0 0.0
        %2448 = vmatpush1.msra.mxu0 0.0
        %2449 = vmatprep.subr.mxu0 0.0
        %2450 = vmatpush1.msra.mxu0 0.0
        %2451 = vmatprep.subr.mxu0 0.0
        %2452 = vmatpush1.msra.mxu0 0.0
        %2453 = vmatprep.subr.mxu0 0.0
        %2454 = vmatpush1.msra.mxu0 0.0
        %2455 = vmatprep.subr.mxu0 0.0
        %2456 = vmatpush1.msra.mxu0 0.0
        %2457 = vmatprep.subr.mxu0 0.0
        %2458 = vmatpush1.msra.mxu0 0.0
        %2459 = vmatprep.subr.mxu0 0.0
        %2460 = vmatpush1.msra.mxu0 0.0
        %2461 = vmatprep.subr.mxu0 0.0
        %2462 = vmatpush1.msra.mxu0 0.0
        %2463 = vmatprep.mubr.f32.mxu0 0.0
        %2464 = vmatmul.mubr.f32.gmra.mrb[0].mxu0 %v622
        %v2465 = vpop.f32.mrb[0].mxu0
        %v2466 = vadd.f32 %v2318, %v2465
        %v2467 = vpop.f32.mrb[0].mxu0
        %2468 = vmatprep.mubr.f32.mxu0 0.0
        %2469 = vmatmul.mubr.f32.gmra.mrb[0].mxu0 %v625
        %v2470 = vpop.f32.mrb[0].mxu0
        %v2471 = vadd.f32 %v2323, %v2470
        %v2472 = vpop.f32.mrb[0].mxu0
        %2473 = vmatprep.mubr.f32.mxu0 0.0
        %2474 = vmatmul.mubr.f32.gmra.mrb[0].mxu0 %v628
        %v2475 = vpop.f32.mrb[0].mxu0
        %v2476 = vadd.f32 %v2328, %v2475
        %v2477 = vpop.f32.mrb[0].mxu0
        %2478 = vmatprep.mubr.f32.mxu0 0.0
        %2479 = vmatmul.mubr.f32.gmra.mrb[0].mxu0 %v631
        %v2480 = vpop.f32.mrb[0].mxu0
        %v2481 = vadd.f32 %v2333, %v2480
        %v2482 = vpop.f32.mrb[0].mxu0
        %2483 = vmatprep.mubr.f32.mxu0 0.0
        %2484 = vmatmul.mubr.f32.gmra.mrb[0].mxu0 %v634
        %v2485 = vpop.f32.mrb[0].mxu0
        %v2486 = vadd.f32 %v2338, %v2485
        %v2487 = vpop.f32.mrb[0].mxu0
        %2488 = vmatprep.mubr.f32.mxu0 0.0
        %2489 = vmatmul.mubr.f32.gmra.mrb[0].mxu0 %v637
        %v2490 = vpop.f32.mrb[0].mxu0
        %v2491 = vadd.f32 %v2343, %v2490
        %v2492 = vpop.f32.mrb[0].mxu0
        %2493 = vmatprep.mubr.f32.mxu0 0.0
        %2494 = vmatmul.mubr.f32.gmra.mrb[0].mxu0 %v640
        %v2495 = vpop.f32.mrb[0].mxu0
        %v2496 = vadd.f32 %v2348, %v2495
        %v2497 = vpop.f32.mrb[0].mxu0
        %2498 = vmatprep.mubr.f32.mxu0 0.0
        %2499 = vmatmul.mubr.f32.gmra.mrb[0].mxu0 %v643
        %v2500 = vpop.f32.mrb[0].mxu0
        %v2501 = vadd.f32 %v2353, %v2500
        %v2502 = vpop.f32.mrb[0].mxu0
        %2503 = vmatprep.mubr.f32.mxu0 0.0
        %2504 = vmatmul.mubr.f32.gmra.mrb[0].mxu0 %v646
        %v2505 = vpop.f32.mrb[0].mxu0
        %v2506 = vadd.f32 %v2358, %v2505
        %v2507 = vpop.f32.mrb[0].mxu0
        %2508 = vmatprep.mubr.f32.mxu0 0.0
        %2509 = vmatmul.mubr.f32.gmra.mrb[0].mxu0 %v649
        %v2510 = vpop.f32.mrb[0].mxu0
        %v2511 = vadd.f32 %v2363, %v2510
        %v2512 = vpop.f32.mrb[0].mxu0
        %2513 = vmatprep.mubr.f32.mxu0 0.0
        %2514 = vmatmul.mubr.f32.gmra.mrb[0].mxu0 %v652
        %v2515 = vpop.f32.mrb[0].mxu0
        %v2516 = vadd.f32 %v2368, %v2515
        %v2517 = vpop.f32.mrb[0].mxu0
        %2518 = vmatprep.mubr.f32.mxu0 0.0
        %2519 = vmatmul.mubr.f32.gmra.mrb[0].mxu0 %v655
        %v2520 = vpop.f32.mrb[0].mxu0
        %v2521 = vadd.f32 %v2373, %v2520
        %v2522 = vpop.f32.mrb[0].mxu0
        %2523 = vmatprep.mubr.f32.mxu0 0.0
        %2524 = vmatmul.mubr.f32.gmra.mrb[0].mxu0 %v658
        %v2525 = vpop.f32.mrb[0].mxu0
        %v2526 = vadd.f32 %v2378, %v2525
        %v2527 = vpop.f32.mrb[0].mxu0
        %2528 = vmatprep.mubr.f32.mxu0 0.0
        %2529 = vmatmul.mubr.f32.gmra.mrb[0].mxu0 %v661
        %v2530 = vpop.f32.mrb[0].mxu0
        %v2531 = vadd.f32 %v2383, %v2530
        %v2532 = vpop.f32.mrb[0].mxu0
        %2533 = vmatprep.mubr.f32.mxu0 0.0
        %2534 = vmatmul.mubr.f32.gmra.mrb[0].mxu0 %v664
        %v2535 = vpop.f32.mrb[0].mxu0
        %v2536 = vadd.f32 %v2388, %v2535
        %v2537 = vpop.f32.mrb[0].mxu0
        %2538 = vmatprep.mubr.f32.mxu0 0.0
        %2539 = vmatmul.mubr.f32.gmra.mrb[0].mxu0 %v667
        %v2540 = vpop.f32.mrb[0].mxu0
        %v2541 = vadd.f32 %v2393, %v2540
        %v2542 = vpop.f32.mrb[0].mxu0
        %2543 = vdwg.mxu0
        %v2544 = vmul.f32 %v1538, %v2195
        %v2545 = vmul.f32 %v1539, %v2195
        %v2546 = vmul.f32 %v1540, %v2195
        %v2547 = vmul.f32 %v1541, %v2195
        %v2548 = vmul.f32 %v1542, %v2195
        %v2549 = vmul.f32 %v1543, %v2195
        %v2550 = vmul.f32 %v1544, %v2195
        %v2551 = vmul.f32 %v1545, %v2195
        %v2552 = vmul.f32 %v1546, %v2195
        %v2553 = vmul.f32 %v1547, %v2195
        %v2554 = vmul.f32 %v1548, %v2195
        %v2555 = vmul.f32 %v1549, %v2195
        %v2556 = vmul.f32 %v1550, %v2195
        %v2557 = vmul.f32 %v1551, %v2195
        %v2558 = vmul.f32 %v1552, %v2195
        %v2559 = vmul.f32 %v1553, %v2195
        %v2560 = vadd.f32 %v2466, %v2544
        %v2561 = vadd.f32 %v2471, %v2545
        %v2562 = vadd.f32 %v2476, %v2546
        %v2563 = vadd.f32 %v2481, %v2547
        %v2564 = vadd.f32 %v2486, %v2548
        %v2565 = vadd.f32 %v2491, %v2549
        %v2566 = vadd.f32 %v2496, %v2550
        %v2567 = vadd.f32 %v2501, %v2551
        %v2568 = vadd.f32 %v2506, %v2552
        %v2569 = vadd.f32 %v2511, %v2553
        %v2570 = vadd.f32 %v2516, %v2554
        %v2571 = vadd.f32 %v2521, %v2555
        %v2572 = vadd.f32 %v2526, %v2556
        %v2573 = vadd.f32 %v2531, %v2557
        %v2574 = vadd.f32 %v2536, %v2558
        %v2575 = vadd.f32 %v2541, %v2559
        %v2576 = vmul.f32 %v1378, %v2198
        %v2577 = vmul.f32 %v1379, %v2198
        %v2578 = vmul.f32 %v1380, %v2198
        %v2579 = vmul.f32 %v1381, %v2198
        %v2580 = vmul.f32 %v1382, %v2198
        %v2581 = vmul.f32 %v1383, %v2198
        %v2582 = vmul.f32 %v1384, %v2198
        %v2583 = vmul.f32 %v1385, %v2198
        %v2584 = vmul.f32 %v1386, %v2198
        %v2585 = vmul.f32 %v1387, %v2198
        %v2586 = vmul.f32 %v1388, %v2198
        %v2587 = vmul.f32 %v1389, %v2198
        %v2588 = vmul.f32 %v1390, %v2198
        %v2589 = vmul.f32 %v1391, %v2198
        %v2590 = vmul.f32 %v1392, %v2198
        %v2591 = vmul.f32 %v1393, %v2198
        %v2592 = vadd.f32 %v2560, %v2576
        %v2593 = vadd.f32 %v2561, %v2577
        %v2594 = vadd.f32 %v2562, %v2578
        %v2595 = vadd.f32 %v2563, %v2579
        %v2596 = vadd.f32 %v2564, %v2580
        %v2597 = vadd.f32 %v2565, %v2581
        %v2598 = vadd.f32 %v2566, %v2582
        %v2599 = vadd.f32 %v2567, %v2583
        %v2600 = vadd.f32 %v2568, %v2584
        %v2601 = vadd.f32 %v2569, %v2585
        %v2602 = vadd.f32 %v2570, %v2586
        %v2603 = vadd.f32 %v2571, %v2587
        %v2604 = vadd.f32 %v2572, %v2588
        %v2605 = vadd.f32 %v2573, %v2589
        %v2606 = vadd.f32 %v2574, %v2590
        %v2607 = vadd.f32 %v2575, %v2591
        %2608 = vst [vmem:[%s361] sm:$0xff] %v2592
        %2609 = vst [vmem:[%s361 + $0x8] sm:$0xff] %v2593
        %2610 = vst [vmem:[%s361 + $0x10] sm:$0xff] %v2594
        %2611 = vst [vmem:[%s361 + $0x18] sm:$0xff] %v2595
        %2612 = vst [vmem:[%s361 + $0x20] sm:$0xff] %v2596
        %2613 = vst [vmem:[%s361 + $0x28] sm:$0xff] %v2597
        %2614 = vst [vmem:[%s361 + $0x30] sm:$0xff] %v2598
        %2615 = vst [vmem:[%s361 + $0x38] sm:$0xff] %v2599
        %2616 = vst [vmem:[%s361 + $0x40] sm:$0xff] %v2600
        %2617 = vst [vmem:[%s361 + $0x48] sm:$0xff] %v2601
        %2618 = vst [vmem:[%s361 + $0x50] sm:$0xff] %v2602
        %2619 = vst [vmem:[%s361 + $0x58] sm:$0xff] %v2603
        %2620 = vst [vmem:[%s361 + $0x60] sm:$0xff] %v2604
        %2621 = vst [vmem:[%s361 + $0x68] sm:$0xff] %v2605
        %2622 = vst [vmem:[%s361 + $0x70] sm:$0xff] %v2606
        %2623 = vst [vmem:[%s361 + $0x78] sm:$0xff] %v2607
        %s2624 = smul.u32 16, %s25
        %p2625 = scmp.lt.s32.totalorder %s2624, 31
        %s2626 = scalar_select %p2625, %s2624, 31
        %s2627 = smul.addr %s2626, 8
        %s2628 = scalar_lea.vmem %s9, %s2627
        %s2629 = sand.u32 %s253, 1
        %s2630 = scalar_lea.sflag [#allocation3], %s2629
        %s2631 = sand.u32 %s253, 1
        %s2632 = smul.addr %s2631, 128
        %s2633 = scalar_lea.vmem [#allocation2], %s2632
        // Predicated region
        $region57: #{tpu_custom_call.1} parent=55 // pred_check
          %p2634 = pneg %p237
        $region58: #{tpu_custom_call.1} parent=55 // pred_check_branch
          %2636 = sbr.rel (%p2634) target = $region60
        $region59: #{tpu_custom_call.1} parent=55 // pred_region
          %s2637 = smul.u32 16, %s25
        $region60: #{tpu_custom_call.1} parent=55 // pred_fallthru
          _
        // Predicated region
        $region61: #{tpu_custom_call.1} parent=55 // pred_check
          %p2638 = pneg %p263
        $region62: #{tpu_custom_call.1} parent=55 // pred_check_branch
          %2640 = sbr.rel (%p2638) target = $region64
        $region63: #{tpu_custom_call.1} parent=55 // pred_region
          %s2641 = smul.u32 16, %s25
          %s2643 = ssub.s32 2048, 2048
          %2644 = vsyncadd %s2630, %s2643
          %s2645 = smul.addr %s2641, 128
          %s2646 = scalar_lea.hbm %s10, %s2645
          %s2647 = sshll.u32 %s2633, 4
          %s2648 = int_to_ptr.vmem [resolvable:$true] %s2647
          %2653 = dma.vmem_to_hbm [thread:$0]  %s2648, 2048, %s2646, %s2630, 128, 128, 8
        $region64: #{tpu_custom_call.1} parent=55 // pred_fallthru
          _
      $region56: #{tpu_custom_call.1} parent=5 // pred_fallthru
        _
      %p2654 = scmp.le.s32.totalorder 2, %s20
      // Predicated region
      $region65: #{tpu_custom_call.1} parent=5 // pred_check
        %p2655 = pneg %p2654
      $region66: #{tpu_custom_call.1} parent=5 // pred_check_branch
        %2657 = sbr.rel (%p2655) target = $region68
      $region67: #{tpu_custom_call.1} parent=5 // pred_region
        %s2658 = ssub.s32 %s20, 2
        // Predicated region
        $region69: #{tpu_custom_call.1} parent=67 // pred_check
          %p2659 = pneg %p243
        $region70: #{tpu_custom_call.1} parent=67 // pred_check_branch
          %2661 = sbr.rel (%p2659) target = $region72
        $region71: #{tpu_custom_call.1} parent=67 // pred_region
          %s2662 = smul.u32 16, %s26
          %p2663 = scmp.lt.s32.totalorder %s2662, 31
          %s2664 = scalar_select %p2663, %s2662, 31
          %s2665 = smul.addr %s2664, 8
          %s2666 = scalar_lea.vmem %s9, %s2665
        $region72: #{tpu_custom_call.1} parent=67 // pred_fallthru
          _
        // Predicated region
        $region73: #{tpu_custom_call.1} parent=67 // pred_check
          %p2667 = pneg %p269
        $region74: #{tpu_custom_call.1} parent=67 // pred_check_branch
          %2669 = sbr.rel (%p2667) target = $region76
        $region75: #{tpu_custom_call.1} parent=67 // pred_region
          %s2670 = sand.u32 %s254, 1
          %s2671 = scalar_lea.sflag [#allocation3], %s2670
          %s2672 = sand.u32 %s254, 1
          %s2673 = smul.addr %s2672, 128
          %s2674 = scalar_lea.vmem [#allocation2], %s2673
          %2675 = dma.done %s2671, 2048
        $region76: #{tpu_custom_call.1} parent=67 // pred_fallthru
          _
      $region68: #{tpu_custom_call.1} parent=5 // pred_fallthru
        _
    $region6: #{tpu_custom_call.1} parent=1 // loop_footer
      %s24 = sadd.s32 1, %s20
    $region7: #{tpu_custom_call.1} parent=1 // loop_footer_branch
      %19 = sbr.rel target = $region3
    $region8: #{tpu_custom_call.1} parent=1 // loop_exit
      _
    %2676 = vsyncpa [#allocation3], 1
    %s2677 = scalar_lea.sflag [#allocation3], 1
    %2678 = vsyncpa %s2677, 1

</llo_original>
